<compile_context>
chip_gen: v7x
topology: tpu7x:2x2x1
jax: 0.10.0
libtpu: 0.0.40
codegen_flags: <defaults>
</compile_context>

<pallas_src>
import functools
import math

import numpy as np
import jax
import jax.numpy as jnp
from jax import lax
from jax.experimental import pallas as pl
from jax.experimental.pallas import tpu as pltpu


# ----------------------------------------------------------------------------
# helpers
# ----------------------------------------------------------------------------
def _round_up(x, m):
    return ((x + m - 1) // m) * m


def _gelu(x):
    # BERT-style tanh GELU (the reference code's bare `gelu` helper).
    c = math.sqrt(2.0 / math.pi)
    return 0.5 * x * (1.0 + jnp.tanh(c * (x + 0.044715 * x * x * x)))


# ----------------------------------------------------------------------------
# Pallas kernel: fused two-direction relation MLP, packed single output slab.
#   x      : (TN, Dp)   bf16  gathered l2r pair rows (zero padded)
#   w1     : (Dp, Wh)   bf16  packed W1   (cols [0:H)=l2r, [H:2H)=r2l-permuted)
#   w2     : (Wh, Wo)   bf16  packed W2   (block-diagonal copies)
#   w3     : (Wo, Wo)   bf16  packed W3   (copies feeding the logits lanes)
#   b3     : (1,  Wo)   f32   bias in lanes [2R:2R+C) and [2R+C:2R+2C), else 0
# Output:
#   out    : (TN, Wo)   f32   packed slab (see header comment for lane layout)
# ----------------------------------------------------------------------------
def _rel_mlp_kernel(x_ref, w1_ref, w2_ref, w3_ref, b3_ref, out_ref, *, r, c):
    x = x_ref[...]                                           # bf16

    h1 = _gelu(jnp.dot(x, w1_ref[...],
                       preferred_element_type=jnp.float32))  # (TN, Wh) f32
    h2 = _gelu(jnp.dot(h1.astype(jnp.bfloat16), w2_ref[...],
                       preferred_element_type=jnp.float32))  # (TN, Wo) f32
    # h2 is zero outside lanes [0:2R) (padded W2 cols are 0, gelu(0)=0).

    logits = jnp.dot(h2.astype(jnp.bfloat16), w3_ref[...],
                     preferred_element_type=jnp.float32) + b3_ref[...]

    lane = lax.broadcasted_iota(jnp.int32, logits.shape, 1)
    base = 2 * r
    mask_a = (lane >= base) & (lane < base + c)              # l2r class lanes
    mask_b = (lane >= base + c) & (lane < base + 2 * c)      # r2l class lanes
    neg = jnp.float32(-1e30)

    def masked_logp(mask):
        l = jnp.where(mask, logits, neg)
        m = jnp.max(l, axis=-1, keepdims=True)
        e = jnp.exp(l - m)                                   # 0 outside mask
        s = jnp.sum(e, axis=-1, keepdims=True)
        lp = (l - m) - jnp.log(s)
        return jnp.where(mask, lp, 0.0)

    # disjoint lane supports -> simple add composes the packed slab
    out_ref[...] = h2 + masked_logp(mask_a) + masked_logp(mask_b)


def rel_mlp_pallas(x, w1, w2, w3, b3, *, r, c, tn):
    """x: (Np, Dp) bf16, Np % tn == 0.  Returns packed (Np, Wo) f32 slab."""
    Np, Dp = x.shape
    Wh = w1.shape[1]
    Wo = w2.shape[1]

    kernel = functools.partial(_rel_mlp_kernel, r=r, c=c)
    row = lambda i: (i, 0)     # row-tiled operands
    full = lambda i: (0, 0)    # resident weights (constant index_map)

    return pl.pallas_call(
        kernel,
        out_shape=jax.ShapeDtypeStruct((Np, Wo), jnp.float32),
        grid=(Np // tn,),
        in_specs=[
            pl.BlockSpec((tn, Dp), row),
            pl.BlockSpec((Dp, Wh), full),
            pl.BlockSpec((Wh, Wo), full),
            pl.BlockSpec((Wo, Wo), full),
            pl.BlockSpec((1, Wo), full),
        ],
        out_specs=pl.BlockSpec((tn, Wo), row),
        compiler_params=pltpu.CompilerParams(
            dimension_semantics=("parallel",)),   # shards rows across v7x's 2 TCs
    )(x, w1, w2, w3, b3)


# ----------------------------------------------------------------------------
# RELModel in JAX (gather/embedding glue in XLA, MLP hot path in Pallas)
# ----------------------------------------------------------------------------
class RELModelJAX:
    TN = 512  # preferred rows per grid step (shrunk adaptively for tiny N)

    def __init__(self, params, sizes, key):
        self.params = params
        self.sizes = sizes
        etype_dim = params["etype_dim"]
        bert_dim = params["bert_dim"]
        if not params["ner_reduce"]:
            ent_dim = bert_dim * 3 + etype_dim
        else:
            ent_dim = params["ner_reduced_size"] + etype_dim
        self.ent_dim = ent_dim
        din = 2 * ent_dim + bert_dim
        self.din = din
        H = params["hidden_dim"]
        R = params["rel_reduced_size"]
        C = sizes["rel_size"]
        self.H, self.R, self.C = H, R, C

        # packed / padded dims (all multiples of 128 -> lane-dense, MXU aligned)
        self.Dp = _round_up(din, 128)
        self.Wh = _round_up(2 * H, 128)               # packed layer-1 width
        self.Wo = _round_up(max(2 * R + 2 * C, 128), 128)  # packed output width

        k = jax.random.split(key, 5)
        # nn.Embedding(etype_size+1, etype_dim, padding_idx=etype_size)
        emb = 0.02 * jax.random.normal(k[0], (sizes["etype_size"] + 1, etype_dim),
                                       dtype=jnp.float32)
        self.type_embed = emb.at[sizes["etype_size"]].set(0.0)  # padding row = 0
        # nn.Linear weights stored transposed: (in, out); layers 1 & 2 biasless.
        self.w1 = 0.02 * jax.random.normal(k[1], (din, H), dtype=jnp.float32)
        self.w2 = 0.02 * jax.random.normal(k[2], (H, R), dtype=jnp.float32)
        self.w3 = 0.02 * jax.random.normal(k[3], (R, C), dtype=jnp.float32)
        self.b3 = 0.02 * jax.random.normal(k[4], (C,), dtype=jnp.float32)

        # r2l direction == l2r input with its two ent_dim slabs swapped, which
        # equals using a row-permuted W1 on the *same* l2r input.
        w1_perm = jnp.concatenate(
            [self.w1[ent_dim:2 * ent_dim], self.w1[:ent_dim], self.w1[2 * ent_dim:]],
            axis=0)

        # packed kernel weights (bf16 matmul, fp32 accumulation in-kernel)
        w1p = jnp.zeros((self.Dp, self.Wh), jnp.float32)
        w1p = w1p.at[:din, :H].set(self.w1)
        w1p = w1p.at[:din, H:2 * H].set(w1_perm)
        self.w1_pack = w1p.astype(jnp.bfloat16)

        w2p = jnp.zeros((self.Wh, self.Wo), jnp.float32)
        w2p = w2p.at[:H, :R].set(self.w2)                     # l2r -> lanes [0:R)
        w2p = w2p.at[H:2 * H, R:2 * R].set(self.w2)           # r2l -> lanes [R:2R)
        self.w2_pack = w2p.astype(jnp.bfloat16)

        w3p = jnp.zeros((self.Wo, self.Wo), jnp.float32)
        w3p = w3p.at[:R, 2 * R:2 * R + C].set(self.w3)        # logits l2r
        w3p = w3p.at[R:2 * R, 2 * R + C:2 * R + 2 * C].set(self.w3)  # logits r2l
        self.w3_pack = w3p.astype(jnp.bfloat16)

        b3p = jnp.zeros((self.Wo,), jnp.float32)
        b3p = b3p.at[2 * R:2 * R + C].set(self.b3)
        b3p = b3p.at[2 * R + C:2 * R + 2 * C].set(self.b3)
        self.b3_pack = b3p.reshape(1, self.Wo)

    def _create_type_representation(self, etypes):
        # -1 -> padding index (etype_size), then embedding lookup
        pad_idx = self.sizes["etype_size"]
        etypes = jnp.where(etypes == -1, pad_idx, etypes)
        return jnp.take(self.type_embed, etypes, axis=0)  # (B, E, etype_dim)

    def forward(self, batch_input):
        ent_embeds = batch_input["ent_embeds"]            # (B, E, 3*bert_dim)
        etypes = batch_input["ent_types"]                 # (B, E) int32
        sent_embeds = batch_input["sentence_embeds"]      # (B, bert_dim)
        p_indices = batch_input["pairs_idx"]              # (3, N) int32: (b, l, r)

        type_embeds = self._create_type_representation(etypes)
        pair_embeds = jnp.concatenate([ent_embeds, type_embeds], axis=-1)  # (B,E,ent_dim)
        type2_embeds = pair_embeds                        # "enttoks_type_embeds"

        b_idx, l_idx, r_idx = p_indices[0], p_indices[1], p_indices[2]
        N = int(p_indices.shape[1])
        if N == 0:
            return {"valid": False}

        # Only the l2r rows are materialized; the r2l direction is handled
        # inside the kernel by the row-permuted copy of W1.
        # TODO(synk): a PrefetchScalarGridSpec in-kernel gather (pairs_idx as
        # scalar prefetch + pl.Element row maps) would avoid this HBM round
        # trip entirely; kept in XLA here for simplicity.
        l2r_embeds = jnp.concatenate(
            [pair_embeds[b_idx, l_idx], pair_embeds[b_idx, r_idx], sent_embeds[b_idx]],
            axis=-1)                                      # (N, 2*ent_dim + bert_dim)

        # TODO(synk): training-mode dropout on pair_embeds is omitted (eval
        # path); the permuted-W1 r2l trick requires no per-row noise on x.
        np128 = _round_up(N, 128)
        tn = min(self.TN, np128)
        Np = _round_up(np128, tn)
        # single pad of the bf16 cast (no zeros().at[].set() second copy)
        x = jnp.pad(l2r_embeds.astype(jnp.bfloat16),
                    ((0, Np - N), (0, self.Dp - self.din)))

        slab = rel_mlp_pallas(x, self.w1_pack, self.w2_pack, self.w3_pack,
                              self.b3_pack, r=self.R, c=self.C, tn=tn)

        R, C = self.R, self.C
        rel_l2r_embeds = slab[:N, 0:R]
        rel_r2l_embeds = slab[:N, R:2 * R]
        l2r_logp = slab[:N, 2 * R:2 * R + C]
        r2l_logp = slab[:N, 2 * R + C:2 * R + 2 * C]
        # preds = softmax(logits) == exp(log_softmax(logits)) exactly
        l2r_probs = jnp.exp(l2r_logp)
        r2l_probs = jnp.exp(r2l_logp)

        # TODO(synk): python-dict ground-truth lookup (rgtruth) and calc_stats()
        # are host-side python objects with no Pallas equivalent; use synthetic
        # "1:Other:2" labels for the loss here.
        other_idx = self.params["other_rel_idx"]
        l2r_truth = jnp.full((N,), other_idx, dtype=jnp.int32)
        r2l_truth = jnp.full((N,), other_idx, dtype=jnp.int32)

        def xent_from_logp(logp, labels):
            return -jnp.mean(jnp.take_along_axis(logp, labels[:, None], axis=-1))

        acc_loss = xent_from_logp(l2r_logp, l2r_truth) + xent_from_logp(r2l_logp, r2l_truth)

        return {
            "valid": True,
            "preds": (l2r_probs, r2l_probs),
            "truth": (l2r_truth, r2l_truth),
            "enttoks_type_embeds": type2_embeds,
            "rel_embeds": rel_l2r_embeds,
            "rel_r2l_embeds": rel_r2l_embeds,
            "pair4class": pair_embeds,
            "pairs_idx": p_indices,
            "loss": acc_loss,
        }


# ----------------------------------------------------------------------------
if __name__ == "__main__":
    # small synthetic configuration
    params = dict(
        etype_dim=8,
        bert_dim=32,
        ner_reduce=False,
        ner_reduced_size=0,
        hidden_dim=64,
        rel_reduced_size=32,
        direction="both",
        dropout=0.0,
        other_rel_idx=0,
    )
    sizes = dict(etype_size=6, rel_size=10)

    B, E = 2, 4  # batch, entities per sentence
    key = jax.random.PRNGKey(0)
    k_model, k_ent, k_sent, k_type = jax.random.split(key, 4)

    model = RELModelJAX(params, sizes, k_model)

    ent_embeds = jax.random.normal(k_ent, (B, E, 3 * params["bert_dim"]),
                                   dtype=jnp.float32)
    sent_embeds = jax.random.normal(k_sent, (B, params["bert_dim"]),
                                    dtype=jnp.float32)
    ent_types = jax.random.randint(k_type, (B, E), -1, sizes["etype_size"],
                                   dtype=jnp.int32)  # includes -1 (padding) cases

    # candidate pair indices (b, l, r) for all l < r in each sentence
    bb, ll, rr = [], [], []
    for b in range(B):
        for l in range(E):
            for r in range(l + 1, E):
                bb.append(b); ll.append(l); rr.append(r)
    pairs_idx = jnp.asarray(np.stack([bb, ll, rr]), dtype=jnp.int32)  # (3, N)

    batch_input = {
        "ent_embeds": ent_embeds,
        "ent_types": ent_types,
        "sentence_embeds": sent_embeds,
        "pairs_idx": pairs_idx,
    }

    out = model.forward(batch_input)
    jax.block_until_ready(out["loss"])
    jax.block_until_ready(out["preds"][0])

    N = pairs_idx.shape[1]
    C = sizes["rel_size"]
    assert out["preds"][0].shape == (N, C)
    assert out["preds"][1].shape == (N, C)
    assert out["rel_embeds"].shape == (N, params["rel_reduced_size"])
    assert out["pair4class"].shape == (B, E, 3 * params["bert_dim"] + params["etype_dim"])
    # softmax rows sum to 1 (probs = exp(exact log-softmax))
    assert np.allclose(np.asarray(jnp.sum(out["preds"][0], axis=-1)), 1.0, atol=1e-3)
    assert np.allclose(np.asarray(jnp.sum(out["preds"][1], axis=-1)), 1.0, atol=1e-3)
    assert np.isfinite(float(out["loss"]))

    # fp32 / unpadded reference check (validates packing, masking, bf16 path
    # and the permuted-W1 r2l trick)
    type_embeds_ref = model._create_type_representation(ent_types)
    pair_embeds_ref = jnp.concatenate([ent_embeds, type_embeds_ref], axis=-1)
    b_i, l_i, r_i = pairs_idx[0], pairs_idx[1], pairs_idx[2]
    l2r_ref = jnp.concatenate([pair_embeds_ref[b_i, l_i], pair_embeds_ref[b_i, r_i],
                               sent_embeds[b_i]], axis=-1)
    r2l_ref = jnp.concatenate([pair_embeds_ref[b_i, r_i], pair_embeds_ref[b_i, l_i],
                               sent_embeds[b_i]], axis=-1)

    def ref_head(xr):
        h2 = _gelu(_gelu(xr @ model.w1) @ model.w2)
        logits = h2 @ model.w3 + model.b3
        return h2, jax.nn.softmax(logits, axis=-1)

    ref_h2_l2r, ref_p_l2r = ref_head(l2r_ref)
    ref_h2_r2l, ref_p_r2l = ref_head(r2l_ref)
    assert np.allclose(np.asarray(out["preds"][0]), np.asarray(ref_p_l2r), atol=2e-2)
    assert np.allclose(np.asarray(out["preds"][1]), np.asarray(ref_p_r2l), atol=2e-2)
    assert np.allclose(np.asarray(out["rel_embeds"]), np.asarray(ref_h2_l2r), atol=2e-2)
    assert np.allclose(np.asarray(out["rel_r2l_embeds"]), np.asarray(ref_h2_r2l), atol=2e-2)

    print("KERNEL_OK")
</pallas_src>

<mosaic_0001>
module attributes {stable_mosaic.version = 11 : i64} {
  func.func @_rel_mlp_kernel(%arg0: i32, %arg1: memref<128x256xbf16, #tpu.memory_space<vmem>>, %arg2: memref<256x128xbf16, #tpu.memory_space<vmem>>, %arg3: memref<128x128xbf16, #tpu.memory_space<vmem>>, %arg4: memref<128x128xbf16, #tpu.memory_space<vmem>>, %arg5: memref<1x128xf32, #tpu.memory_space<vmem>>, %arg6: memref<128x128xf32, #tpu.memory_space<vmem>>) attributes {dimension_semantics = [#tpu.dimension_semantics<parallel>], iteration_bounds = array<i64: 1>, scalar_prefetch = 0 : i64, scratch_operands = 0 : i64, tpu.core_type = #tpu.core_type<tc>, window_params = [{transform_indices = @transform_0, window_bounds = array<i64: 128, 256>}, {pipeline_mode = #tpu.pipeline_mode<synchronous>, transform_indices = @transform_1, window_bounds = array<i64: 256, 128>}, {pipeline_mode = #tpu.pipeline_mode<synchronous>, transform_indices = @transform_2, window_bounds = array<i64: 128, 128>}, {pipeline_mode = #tpu.pipeline_mode<synchronous>, transform_indices = @transform_3, window_bounds = array<i64: 128, 128>}, {pipeline_mode = #tpu.pipeline_mode<synchronous>, transform_indices = @transform_4, window_bounds = array<i64: 1, 128>}, {transform_indices = @transform_5, window_bounds = array<i64: 128, 128>}]} {
    %c0 = arith.constant 0 : index
    %c0_0 = arith.constant 0 : index
    %0 = vector.load %arg1[%c0, %c0_0] : memref<128x256xbf16, #tpu.memory_space<vmem>>, vector<128x256xbf16>
    %c0_1 = arith.constant 0 : index
    %c0_2 = arith.constant 0 : index
    %1 = vector.load %arg2[%c0_1, %c0_2] : memref<256x128xbf16, #tpu.memory_space<vmem>>, vector<256x128xbf16>
    %cst = arith.constant dense<0.000000e+00> : vector<128x128xf32>
    %2 = tpu.matmul %0, %1, %cst {dimension_numbers = #tpu.dot_dimension_numbers<[1], [0], [0], [1], [0, 0, 1, 1], [], []>} : vector<128x256xbf16>, vector<256x128xbf16>, vector<128x128xf32> -> vector<128x128xf32>
    %cst_3 = arith.constant 5.000000e-01 : f32
    %3 = vector.broadcast %cst_3 : f32 to vector<128x128xf32>
    %4 = arith.mulf %3, %2 : vector<128x128xf32>
    %cst_4 = arith.constant 4.471500e-02 : f32
    %5 = vector.broadcast %cst_4 : f32 to vector<128x128xf32>
    %6 = arith.mulf %5, %2 : vector<128x128xf32>
    %7 = arith.mulf %6, %2 : vector<128x128xf32>
    %8 = arith.mulf %7, %2 : vector<128x128xf32>
    %9 = arith.addf %2, %8 : vector<128x128xf32>
    %cst_5 = arith.constant 0.797884583 : f32
    %10 = vector.broadcast %cst_5 : f32 to vector<128x128xf32>
    %11 = arith.mulf %10, %9 : vector<128x128xf32>
    %12 = math.tanh %11 : vector<128x128xf32>
    %cst_6 = arith.constant 1.000000e+00 : f32
    %13 = vector.broadcast %cst_6 : f32 to vector<128x128xf32>
    %14 = arith.addf %13, %12 : vector<128x128xf32>
    %15 = arith.mulf %4, %14 : vector<128x128xf32>
    %16 = arith.truncf %15 : vector<128x128xf32> to vector<128x128xbf16>
    %c0_7 = arith.constant 0 : index
    %c0_8 = arith.constant 0 : index
    %17 = vector.load %arg3[%c0_7, %c0_8] : memref<128x128xbf16, #tpu.memory_space<vmem>>, vector<128x128xbf16>
    %cst_9 = arith.constant dense<0.000000e+00> : vector<128x128xf32>
    %18 = tpu.matmul %16, %17, %cst_9 {dimension_numbers = #tpu.dot_dimension_numbers<[1], [0], [0], [1], [0, 0, 1, 1], [], []>} : vector<128x128xbf16>, vector<128x128xbf16>, vector<128x128xf32> -> vector<128x128xf32>
    %cst_10 = arith.constant 5.000000e-01 : f32
    %19 = vector.broadcast %cst_10 : f32 to vector<128x128xf32>
    %20 = arith.mulf %19, %18 : vector<128x128xf32>
    %cst_11 = arith.constant 4.471500e-02 : f32
    %21 = vector.broadcast %cst_11 : f32 to vector<128x128xf32>
    %22 = arith.mulf %21, %18 : vector<128x128xf32>
    %23 = arith.mulf %22, %18 : vector<128x128xf32>
    %24 = arith.mulf %23, %18 : vector<128x128xf32>
    %25 = arith.addf %18, %24 : vector<128x128xf32>
    %cst_12 = arith.constant 0.797884583 : f32
    %26 = vector.broadcast %cst_12 : f32 to vector<128x128xf32>
    %27 = arith.mulf %26, %25 : vector<128x128xf32>
    %28 = math.tanh %27 : vector<128x128xf32>
    %cst_13 = arith.constant 1.000000e+00 : f32
    %29 = vector.broadcast %cst_13 : f32 to vector<128x128xf32>
    %30 = arith.addf %29, %28 : vector<128x128xf32>
    %31 = arith.mulf %20, %30 : vector<128x128xf32>
    %32 = arith.truncf %31 : vector<128x128xf32> to vector<128x128xbf16>
    %c0_14 = arith.constant 0 : index
    %c0_15 = arith.constant 0 : index
    %33 = vector.load %arg4[%c0_14, %c0_15] : memref<128x128xbf16, #tpu.memory_space<vmem>>, vector<128x128xbf16>
    %cst_16 = arith.constant dense<0.000000e+00> : vector<128x128xf32>
    %34 = tpu.matmul %32, %33, %cst_16 {dimension_numbers = #tpu.dot_dimension_numbers<[1], [0], [0], [1], [0, 0, 1, 1], [], []>} : vector<128x128xbf16>, vector<128x128xbf16>, vector<128x128xf32> -> vector<128x128xf32>
    %c0_17 = arith.constant 0 : index
    %c0_18 = arith.constant 0 : index
    %35 = vector.load %arg5[%c0_17, %c0_18] : memref<1x128xf32, #tpu.memory_space<vmem>>, vector<1x128xf32>
    %36 = vector.broadcast %35 : vector<1x128xf32> to vector<128x128xf32>
    %37 = arith.addf %34, %36 : vector<128x128xf32>
    %38 = tpu.iota {dimensions = array<i32: 1>} : vector<128x128xi32>
    %c64_i32 = arith.constant 64 : i32
    %39 = vector.broadcast %c64_i32 : i32 to vector<128x128xi32>
    %40 = arith.cmpi sge, %38, %39 : vector<128x128xi32>
    %c74_i32 = arith.constant 74 : i32
    %41 = vector.broadcast %c74_i32 : i32 to vector<128x128xi32>
    %42 = arith.cmpi slt, %38, %41 : vector<128x128xi32>
    %43 = arith.andi %40, %42 : vector<128x128xi1>
    %c74_i32_19 = arith.constant 74 : i32
    %44 = vector.broadcast %c74_i32_19 : i32 to vector<128x128xi32>
    %45 = arith.cmpi sge, %38, %44 : vector<128x128xi32>
    %c84_i32 = arith.constant 84 : i32
    %46 = vector.broadcast %c84_i32 : i32 to vector<128x128xi32>
    %47 = arith.cmpi slt, %38, %46 : vector<128x128xi32>
    %48 = arith.andi %45, %47 : vector<128x128xi1>
    %cst_20 = arith.constant -1.000000e+30 : f32
    %49 = vector.broadcast %cst_20 : f32 to vector<128x128xf32>
    %50 = arith.select %43, %37, %49 : vector<128x128xi1>, vector<128x128xf32>
    %cst_21 = arith.constant dense<0xFF800000> : vector<128xf32>
    %51 = vector.multi_reduction <maximumf>, %50, %cst_21 [1] : vector<128x128xf32> to vector<128xf32>
    %52 = vector.shape_cast %51 : vector<128xf32> to vector<128x1xf32>
    %53 = vector.broadcast %52 : vector<128x1xf32> to vector<128x128xf32>
    %54 = arith.subf %50, %53 : vector<128x128xf32>
    %55 = math.exp %54 : vector<128x128xf32>
    %cst_22 = arith.constant dense<0.000000e+00> : vector<128xf32>
    %56 = vector.multi_reduction <add>, %55, %cst_22 [1] : vector<128x128xf32> to vector<128xf32>
    %57 = vector.shape_cast %56 : vector<128xf32> to vector<128x1xf32>
    %58 = vector.broadcast %52 : vector<128x1xf32> to vector<128x128xf32>
    %59 = arith.subf %50, %58 : vector<128x128xf32>
    %60 = math.log %57 : vector<128x1xf32>
    %61 = vector.broadcast %60 : vector<128x1xf32> to vector<128x128xf32>
    %62 = arith.subf %59, %61 : vector<128x128xf32>
    %cst_23 = arith.constant 0.000000e+00 : f32
    %63 = vector.broadcast %cst_23 : f32 to vector<128x128xf32>
    %64 = arith.select %43, %62, %63 : vector<128x128xi1>, vector<128x128xf32>
    %65 = arith.addf %31, %64 : vector<128x128xf32>
    %cst_24 = arith.constant -1.000000e+30 : f32
    %66 = vector.broadcast %cst_24 : f32 to vector<128x128xf32>
    %67 = arith.select %48, %37, %66 : vector<128x128xi1>, vector<128x128xf32>
    %cst_25 = arith.constant dense<0xFF800000> : vector<128xf32>
    %68 = vector.multi_reduction <maximumf>, %67, %cst_25 [1] : vector<128x128xf32> to vector<128xf32>
    %69 = vector.shape_cast %68 : vector<128xf32> to vector<128x1xf32>
    %70 = vector.broadcast %69 : vector<128x1xf32> to vector<128x128xf32>
    %71 = arith.subf %67, %70 : vector<128x128xf32>
    %72 = math.exp %71 : vector<128x128xf32>
    %cst_26 = arith.constant dense<0.000000e+00> : vector<128xf32>
    %73 = vector.multi_reduction <add>, %72, %cst_26 [1] : vector<128x128xf32> to vector<128xf32>
    %74 = vector.shape_cast %73 : vector<128xf32> to vector<128x1xf32>
    %75 = vector.broadcast %69 : vector<128x1xf32> to vector<128x128xf32>
    %76 = arith.subf %67, %75 : vector<128x128xf32>
    %77 = math.log %74 : vector<128x1xf32>
    %78 = vector.broadcast %77 : vector<128x1xf32> to vector<128x128xf32>
    %79 = arith.subf %76, %78 : vector<128x128xf32>
    %cst_27 = arith.constant 0.000000e+00 : f32
    %80 = vector.broadcast %cst_27 : f32 to vector<128x128xf32>
    %81 = arith.select %48, %79, %80 : vector<128x128xi1>, vector<128x128xf32>
    %82 = arith.addf %65, %81 : vector<128x128xf32>
    %c0_28 = arith.constant 0 : index
    %c0_29 = arith.constant 0 : index
    %83 = vector.load %arg6[%c0_28, %c0_29] : memref<128x128xf32, #tpu.memory_space<vmem>>, vector<128x128xf32>
    tpu.vector_store %arg6[%c0_28, %c0_29], %82 {strides = array<i32>} : memref<128x128xf32, #tpu.memory_space<vmem>>, vector<128x128xf32>,
    return
  }
  func.func @transform_0(%arg0: i32) -> (i32, i32) {
    %c0_i32 = arith.constant 0 : i32
    %c0_i32_0 = arith.constant 0 : i32
    return %arg0, %c0_i32 : i32, i32
  }
  func.func @transform_1(%arg0: i32) -> (i32, i32) {
    %c0_i32 = arith.constant 0 : i32
    %c0_i32_0 = arith.constant 0 : i32
    %c0_i32_1 = arith.constant 0 : i32
    return %c0_i32, %c0_i32_0 : i32, i32
  }
  func.func @transform_2(%arg0: i32) -> (i32, i32) {
    %c0_i32 = arith.constant 0 : i32
    %c0_i32_0 = arith.constant 0 : i32
    %c0_i32_1 = arith.constant 0 : i32
    return %c0_i32, %c0_i32_0 : i32, i32
  }
  func.func @transform_3(%arg0: i32) -> (i32, i32) {
    %c0_i32 = arith.constant 0 : i32
    %c0_i32_0 = arith.constant 0 : i32
    %c0_i32_1 = arith.constant 0 : i32
    return %c0_i32, %c0_i32_0 : i32, i32
  }
  func.func @transform_4(%arg0: i32) -> (i32, i32) {
    %c0_i32 = arith.constant 0 : i32
    %c0_i32_0 = arith.constant 0 : i32
    %c0_i32_1 = arith.constant 0 : i32
    return %c0_i32, %c0_i32_0 : i32, i32
  }
  func.func @transform_5(%arg0: i32) -> (i32, i32) {
    %c0_i32 = arith.constant 0 : i32
    %c0_i32_0 = arith.constant 0 : i32
    return %arg0, %c0_i32 : i32, i32
  }
}

</mosaic_0001>

<llo_original>
// kernel: tpu_custom_call.1
$region0: #{tpu_custom_call.1}
  #allocation0 [shape = 'u32[]', space=smem, size = 0x4, offset = 0x4, fixed_abs, tag = 'smem constant byte address 0x4 - core index']
  #allocation1 [shape = 'u32[144,128]{1,0:T(1,128)}', space=vmem, size = 0x12000, scoped, tag = 'internal scratch']
  %s0 = inlined_call_operand.hbm [shape: bf16[128,256], index: 0, kind: input, shape index: {}]
  %s1 = inlined_call_operand.hbm [shape: bf16[256,128], index: 1, kind: input, shape index: {}]
  %s2 = inlined_call_operand.hbm [shape: bf16[128,128], index: 2, kind: input, shape index: {}]
  %s3 = inlined_call_operand.hbm [shape: bf16[128,128], index: 3, kind: input, shape index: {}]
  %s4 = inlined_call_operand.vmem [shape: f32[1,128], index: 4, kind: input, shape index: {}]
  %s5 = inlined_call_operand.hbm [shape: f32[128,128], index: 5, kind: output, shape index: {}]
  %s6 = sld [smem:[#allocation0]]
  $region46: #{tpu_custom_call.1} parent=0
    _
  %s8 = ssub.s32 1, %s6
  %s9 = scalar_select 0, %s8, %s6
  $region1: #{tpu_custom_call.1} parent=0
    #allocation2 [shape = 'u8[65536]{0}', space=vmem, size = 0x10000, scoped, tag = 'input window, operand 0, single buffered']
    #allocation3 [shape = 's32[1]{0}', space=sflag, size = 0x4, scoped, tag = 'scoped memory for tpu_custom_call.1']
    #allocation4 [shape = 's32[1]{0}', space=sflag, size = 0x4, scoped, tag = 'scoped memory for tpu_custom_call.1']
    #allocation5 [shape = 'u8[65536]{0}', space=vmem, size = 0x10000, scoped, tag = 'input window, operand 1, single buffered']
    #allocation6 [shape = 's32[1]{0}', space=sflag, size = 0x4, scoped, tag = 'scoped memory for tpu_custom_call.1']
    #allocation7 [shape = 'u8[32768]{0}', space=vmem, size = 0x8000, scoped, tag = 'input window, operand 2, single buffered']
    #allocation8 [shape = 'u8[32768]{0}', space=vmem, size = 0x8000, scoped, tag = 'input window, operand 3, single buffered']
    #allocation9 [shape = 's32[1]{0}', space=sflag, size = 0x4, scoped, tag = 'scoped memory for tpu_custom_call.1']
    #allocation10 [shape = 'u8[65536]{0}', space=vmem, size = 0x10000, scoped, tag = 'output window, operand 0, single buffered']
    %10 = vsyncpa [#allocation3], 0
    %11 = vsyncpa [#allocation6], 0
    %12 = vsyncpa [#allocation9], 0
    %13 = vsyncpa [#allocation4], 0
    // Predicated region
    $region2: #{tpu_custom_call.1} parent=1 // pred_check
      _
    $region3: #{tpu_custom_call.1} parent=1 // pred_check_branch
      %15 = sbr.rel (0) target = $region5
    $region4: #{tpu_custom_call.1} parent=1 // pred_region
      %s17 = ssub.s32 2048, 2048
      %18 = vsyncadd [#allocation3], %s17
      %s19 = sshll.u32 [#allocation2], 4
      %s20 = int_to_ptr.vmem [resolvable:$true] %s19
      %25 = dma.hbm_to_vmem [thread:$0]  %s0, 2048, %s20, [#allocation3], 128, 128, 8
    $region5: #{tpu_custom_call.1} parent=1 // pred_fallthru
      _
    // Predicated region
    $region6: #{tpu_custom_call.1} parent=1 // pred_check
      _
    $region7: #{tpu_custom_call.1} parent=1 // pred_check_branch
      %27 = sbr.rel (0) target = $region9
    $region8: #{tpu_custom_call.1} parent=1 // pred_region
      %s29 = ssub.s32 2048, 2048
      %30 = vsyncadd [#allocation6], %s29
      %s31 = sshll.u32 [#allocation5], 4
      %s32 = int_to_ptr.vmem [resolvable:$true] %s31
      %37 = dma.hbm_to_vmem [thread:$0]  %s1, 2048, %s32, [#allocation6], 64, 64, 4
    $region9: #{tpu_custom_call.1} parent=1 // pred_fallthru
      _
    // Predicated region
    $region10: #{tpu_custom_call.1} parent=1 // pred_check
      _
    $region11: #{tpu_custom_call.1} parent=1 // pred_check_branch
      %39 = sbr.rel (0) target = $region13
    $region12: #{tpu_custom_call.1} parent=1 // pred_region
      %s41 = ssub.s32 1024, 1024
      %42 = vsyncadd [#allocation6], %s41
      %s43 = sshll.u32 [#allocation7], 4
      %s44 = int_to_ptr.vmem [resolvable:$true] %s43
      %49 = dma.hbm_to_vmem [thread:$0]  %s2, 1024, %s44, [#allocation6], 64, 64, 4
    $region13: #{tpu_custom_call.1} parent=1 // pred_fallthru
      _
    // Predicated region
    $region14: #{tpu_custom_call.1} parent=1 // pred_check
      _
    $region15: #{tpu_custom_call.1} parent=1 // pred_check_branch
      %51 = sbr.rel (0) target = $region17
    $region16: #{tpu_custom_call.1} parent=1 // pred_region
      %s53 = ssub.s32 1024, 1024
      %54 = vsyncadd [#allocation9], %s53
      %s55 = sshll.u32 [#allocation8], 4
      %s56 = int_to_ptr.vmem [resolvable:$true] %s55
      %61 = dma.hbm_to_vmem [thread:$0]  %s3, 1024, %s56, [#allocation9], 64, 64, 4
    $region17: #{tpu_custom_call.1} parent=1 // pred_fallthru
      _
    // Predicated region
    $region18: #{tpu_custom_call.1} parent=1 // pred_check
      _
    $region19: #{tpu_custom_call.1} parent=1 // pred_check_branch
      %63 = sbr.rel (0) target = $region21
    $region20: #{tpu_custom_call.1} parent=1 // pred_region
      _
    $region21: #{tpu_custom_call.1} parent=1 // pred_fallthru
      _
    // Predicated region
    $region22: #{tpu_custom_call.1} parent=1 // pred_check
      _
    $region23: #{tpu_custom_call.1} parent=1 // pred_check_branch
      %65 = sbr.rel (0) target = $region25
    $region24: #{tpu_custom_call.1} parent=1 // pred_region
      %66 = dma.done [#allocation3], 2048
    $region25: #{tpu_custom_call.1} parent=1 // pred_fallthru
      _
    // Predicated region
    $region26: #{tpu_custom_call.1} parent=1 // pred_check
      _
    $region27: #{tpu_custom_call.1} parent=1 // pred_check_branch
      %68 = sbr.rel (0) target = $region29
    $region28: #{tpu_custom_call.1} parent=1 // pred_region
      %69 = dma.done [#allocation6], 2048
    $region29: #{tpu_custom_call.1} parent=1 // pred_fallthru
      _
    // Predicated region
    $region30: #{tpu_custom_call.1} parent=1 // pred_check
      _
    $region31: #{tpu_custom_call.1} parent=1 // pred_check_branch
      %71 = sbr.rel (0) target = $region33
    $region32: #{tpu_custom_call.1} parent=1 // pred_region
      %72 = dma.done [#allocation6], 1024
    $region33: #{tpu_custom_call.1} parent=1 // pred_fallthru
      _
    // Predicated region
    $region34: #{tpu_custom_call.1} parent=1 // pred_check
      _
    $region35: #{tpu_custom_call.1} parent=1 // pred_check_branch
      %74 = sbr.rel (0) target = $region37
    $region36: #{tpu_custom_call.1} parent=1 // pred_region
      %75 = dma.done [#allocation9], 1024
    $region37: #{tpu_custom_call.1} parent=1 // pred_fallthru
      _
    %v77 = vld [vmem:[#allocation2] sm:$0xff]
    %v78 = vld [vmem:[#allocation2 + $0x8] sm:$0xff]
    %v79 = vld [vmem:[#allocation2 + $0x10] sm:$0xff]
    %v80 = vld [vmem:[#allocation2 + $0x18] sm:$0xff]
    %v81 = vld [vmem:[#allocation2 + $0x20] sm:$0xff]
    %v82 = vld [vmem:[#allocation2 + $0x28] sm:$0xff]
    %v83 = vld [vmem:[#allocation2 + $0x30] sm:$0xff]
    %v84 = vld [vmem:[#allocation2 + $0x38] sm:$0xff]
    %v85 = vld [vmem:[#allocation2 + $0x40] sm:$0xff]
    %v86 = vld [vmem:[#allocation2 + $0x48] sm:$0xff]
    %v87 = vld [vmem:[#allocation2 + $0x50] sm:$0xff]
    %v88 = vld [vmem:[#allocation2 + $0x58] sm:$0xff]
    %v89 = vld [vmem:[#allocation2 + $0x60] sm:$0xff]
    %v90 = vld [vmem:[#allocation2 + $0x68] sm:$0xff]
    %v91 = vld [vmem:[#allocation2 + $0x70] sm:$0xff]
    %v92 = vld [vmem:[#allocation2 + $0x78] sm:$0xff]
    %v93 = vld [vmem:[#allocation5] sm:$0xf]
    %v94 = vld [vmem:[#allocation5 + $0x4] sm:$0xf]
    %v95 = vld [vmem:[#allocation5 + $0x8] sm:$0xf]
    %v96 = vld [vmem:[#allocation5 + $0xc] sm:$0xf]
    %v97 = vld [vmem:[#allocation5 + $0x10] sm:$0xf]
    %v98 = vld [vmem:[#allocation5 + $0x14] sm:$0xf]
    %v99 = vld [vmem:[#allocation5 + $0x18] sm:$0xf]
    %v100 = vld [vmem:[#allocation5 + $0x1c] sm:$0xf]
    %v101 = vld [vmem:[#allocation5 + $0x20] sm:$0xf]
    %v102 = vld [vmem:[#allocation5 + $0x24] sm:$0xf]
    %v103 = vld [vmem:[#allocation5 + $0x28] sm:$0xf]
    %v104 = vld [vmem:[#allocation5 + $0x2c] sm:$0xf]
    %v105 = vld [vmem:[#allocation5 + $0x30] sm:$0xf]
    %v106 = vld [vmem:[#allocation5 + $0x34] sm:$0xf]
    %v107 = vld [vmem:[#allocation5 + $0x38] sm:$0xf]
    %v108 = vld [vmem:[#allocation5 + $0x3c] sm:$0xf]
    %v109 = vld [vmem:[#allocation5 + $0x40] sm:$0xf]
    %v110 = vld [vmem:[#allocation5 + $0x44] sm:$0xf]
    %v111 = vld [vmem:[#allocation5 + $0x48] sm:$0xf]
    %v112 = vld [vmem:[#allocation5 + $0x4c] sm:$0xf]
    %v113 = vld [vmem:[#allocation5 + $0x50] sm:$0xf]
    %v114 = vld [vmem:[#allocation5 + $0x54] sm:$0xf]
    %v115 = vld [vmem:[#allocation5 + $0x58] sm:$0xf]
    %v116 = vld [vmem:[#allocation5 + $0x5c] sm:$0xf]
    %v117 = vld [vmem:[#allocation5 + $0x60] sm:$0xf]
    %v118 = vld [vmem:[#allocation5 + $0x64] sm:$0xf]
    %v119 = vld [vmem:[#allocation5 + $0x68] sm:$0xf]
    %v120 = vld [vmem:[#allocation5 + $0x6c] sm:$0xf]
    %v121 = vld [vmem:[#allocation5 + $0x70] sm:$0xf]
    %v122 = vld [vmem:[#allocation5 + $0x74] sm:$0xf]
    %v123 = vld [vmem:[#allocation5 + $0x78] sm:$0xf]
    %v124 = vld [vmem:[#allocation5 + $0x7c] sm:$0xf]
    %v141 = vunpack.c.l.b16 %v77
    %v142 = vunpack.c.h.b16 %v77
    %v143 = vunpack.c.l.b16 %v78
    %v144 = vunpack.c.h.b16 %v78
    %v145 = vunpack.c.l.b16 %v79
    %v146 = vunpack.c.h.b16 %v79
    %v147 = vunpack.c.l.b16 %v80
    %v148 = vunpack.c.h.b16 %v80
    %v149 = vunpack.c.l.b16 %v81
    %v150 = vunpack.c.h.b16 %v81
    %v151 = vunpack.c.l.b16 %v82
    %v152 = vunpack.c.h.b16 %v82
    %v153 = vunpack.c.l.b16 %v83
    %v154 = vunpack.c.h.b16 %v83
    %v155 = vunpack.c.l.b16 %v84
    %v156 = vunpack.c.h.b16 %v84
    %v157 = vunpack.c.l.b16 %v85
    %v158 = vunpack.c.h.b16 %v85
    %v159 = vunpack.c.l.b16 %v86
    %v160 = vunpack.c.h.b16 %v86
    %v161 = vunpack.c.l.b16 %v87
    %v162 = vunpack.c.h.b16 %v87
    %v163 = vunpack.c.l.b16 %v88
    %v164 = vunpack.c.h.b16 %v88
    %v165 = vunpack.c.l.b16 %v89
    %v166 = vunpack.c.h.b16 %v89
    %v167 = vunpack.c.l.b16 %v90
    %v168 = vunpack.c.h.b16 %v90
    %v169 = vunpack.c.l.b16 %v91
    %v170 = vunpack.c.h.b16 %v91
    %v171 = vunpack.c.l.b16 %v92
    %v172 = vunpack.c.h.b16 %v92
    %v173 = vpack.c.b16 %v143, %v141
    %v174 = vpack.c.b16 %v144, %v142
    %v175 = vpack.c.b16 %v147, %v145
    %v176 = vpack.c.b16 %v148, %v146
    %v177 = vpack.c.b16 %v151, %v149
    %v178 = vpack.c.b16 %v152, %v150
    %v179 = vpack.c.b16 %v155, %v153
    %v180 = vpack.c.b16 %v156, %v154
    %v181 = vpack.c.b16 %v159, %v157
    %v182 = vpack.c.b16 %v160, %v158
    %v183 = vpack.c.b16 %v163, %v161
    %v184 = vpack.c.b16 %v164, %v162
    %v185 = vpack.c.b16 %v167, %v165
    %v186 = vpack.c.b16 %v168, %v166
    %v187 = vpack.c.b16 %v171, %v169
    %v188 = vpack.c.b16 %v172, %v170
    %v237 = vunpack.c.l.b16 %v93
    %v238 = vunpack.c.l.b16 %v94
    %v239 = vunpack.c.l.b16 %v95
    %v240 = vunpack.c.l.b16 %v96
    %v241 = vunpack.c.l.b16 %v97
    %v242 = vunpack.c.l.b16 %v98
    %v243 = vunpack.c.l.b16 %v99
    %v244 = vunpack.c.l.b16 %v100
    %v245 = vunpack.c.l.b16 %v101
    %v246 = vunpack.c.l.b16 %v102
    %v247 = vunpack.c.l.b16 %v103
    %v248 = vunpack.c.l.b16 %v104
    %v249 = vunpack.c.l.b16 %v105
    %v250 = vunpack.c.l.b16 %v106
    %v251 = vunpack.c.l.b16 %v107
    %v252 = vunpack.c.l.b16 %v108
    %v253 = vunpack.c.l.b16 %v109
    %v254 = vunpack.c.l.b16 %v110
    %v255 = vunpack.c.l.b16 %v111
    %v256 = vunpack.c.l.b16 %v112
    %v257 = vunpack.c.l.b16 %v113
    %v258 = vunpack.c.l.b16 %v114
    %v259 = vunpack.c.l.b16 %v115
    %v260 = vunpack.c.l.b16 %v116
    %v261 = vunpack.c.l.b16 %v117
    %v262 = vunpack.c.l.b16 %v118
    %v263 = vunpack.c.l.b16 %v119
    %v264 = vunpack.c.l.b16 %v120
    %v265 = vunpack.c.l.b16 %v121
    %v266 = vunpack.c.l.b16 %v122
    %v267 = vunpack.c.l.b16 %v123
    %v268 = vunpack.c.l.b16 %v124
    %v269 = vpack.c.b16 %v238, %v237
    %v270 = vpack.c.b16 %v240, %v239
    %v271 = vpack.c.b16 %v242, %v241
    %v272 = vpack.c.b16 %v244, %v243
    %v273 = vpack.c.b16 %v246, %v245
    %v274 = vpack.c.b16 %v248, %v247
    %v275 = vpack.c.b16 %v250, %v249
    %v276 = vpack.c.b16 %v252, %v251
    %v277 = vpack.c.b16 %v254, %v253
    %v278 = vpack.c.b16 %v256, %v255
    %v279 = vpack.c.b16 %v258, %v257
    %v280 = vpack.c.b16 %v260, %v259
    %v281 = vpack.c.b16 %v262, %v261
    %v282 = vpack.c.b16 %v264, %v263
    %v283 = vpack.c.b16 %v266, %v265
    %v284 = vpack.c.b16 %v268, %v267
    %301 = vmatprep.subr.bf16.mxu0 0
    %302 = vmatpush1.bf16.msra.mxu0 %v269
    %303 = vmatprep.subr.bf16.mxu0 0
    %304 = vmatpush1.bf16.msra.mxu0 %v270
    %305 = vmatprep.subr.bf16.mxu0 0
    %306 = vmatpush1.bf16.msra.mxu0 %v271
    %307 = vmatprep.subr.bf16.mxu0 0
    %308 = vmatpush1.bf16.msra.mxu0 %v272
    %309 = vmatprep.subr.bf16.mxu0 0
    %310 = vmatpush1.bf16.msra.mxu0 %v273
    %311 = vmatprep.subr.bf16.mxu0 0
    %312 = vmatpush1.bf16.msra.mxu0 %v274
    %313 = vmatprep.subr.bf16.mxu0 0
    %314 = vmatpush1.bf16.msra.mxu0 %v275
    %315 = vmatprep.subr.bf16.mxu0 0
    %316 = vmatpush1.bf16.msra.mxu0 %v276
    %317 = vmatprep.subr.bf16.mxu0 0
    %318 = vmatpush1.bf16.msra.mxu0 %v277
    %319 = vmatprep.subr.bf16.mxu0 0
    %320 = vmatpush1.bf16.msra.mxu0 %v278
    %321 = vmatprep.subr.bf16.mxu0 0
    %322 = vmatpush1.bf16.msra.mxu0 %v279
    %323 = vmatprep.subr.bf16.mxu0 0
    %324 = vmatpush1.bf16.msra.mxu0 %v280
    %325 = vmatprep.subr.bf16.mxu0 0
    %326 = vmatpush1.bf16.msra.mxu0 %v281
    %327 = vmatprep.subr.bf16.mxu0 0
    %328 = vmatpush1.bf16.msra.mxu0 %v282
    %329 = vmatprep.subr.bf16.mxu0 0
    %330 = vmatpush1.bf16.msra.mxu0 %v283
    %331 = vmatprep.subr.bf16.mxu0 0
    %332 = vmatpush1.bf16.msra.mxu0 %v284
    %333 = vmatprep.mubr.bf16.mxu0 %v174
    %334 = vmatmul.mubr.bf16.gmra.mrb[0].mxu0 %v173
    %v335 = vpop.f32.mrb[0].mxu0
    %v336 = vadd.f32 0.0, %v335
    %v337 = vpop.f32.mrb[0].mxu0
    %v338 = vpop.f32.mrb[0].mxu0
    %v339 = vadd.f32 0.0, %v338
    %v340 = vpop.f32.mrb[0].mxu0
    %341 = vmatprep.mubr.bf16.mxu0 %v176
    %342 = vmatmul.mubr.bf16.gmra.mrb[0].mxu0 %v175
    %v343 = vpop.f32.mrb[0].mxu0
    %v344 = vadd.f32 0.0, %v343
    %v345 = vpop.f32.mrb[0].mxu0
    %v346 = vpop.f32.mrb[0].mxu0
    %v347 = vadd.f32 0.0, %v346
    %v348 = vpop.f32.mrb[0].mxu0
    %349 = vmatprep.mubr.bf16.mxu0 %v178
    %350 = vmatmul.mubr.bf16.gmra.mrb[0].mxu0 %v177
    %v351 = vpop.f32.mrb[0].mxu0
    %v352 = vadd.f32 0.0, %v351
    %v353 = vpop.f32.mrb[0].mxu0
    %v354 = vpop.f32.mrb[0].mxu0
    %v355 = vadd.f32 0.0, %v354
    %v356 = vpop.f32.mrb[0].mxu0
    %357 = vmatprep.mubr.bf16.mxu0 %v180
    %358 = vmatmul.mubr.bf16.gmra.mrb[0].mxu0 %v179
    %v359 = vpop.f32.mrb[0].mxu0
    %v360 = vadd.f32 0.0, %v359
    %v361 = vpop.f32.mrb[0].mxu0
    %v362 = vpop.f32.mrb[0].mxu0
    %v363 = vadd.f32 0.0, %v362
    %v364 = vpop.f32.mrb[0].mxu0
    %365 = vmatprep.mubr.bf16.mxu0 %v182
    %366 = vmatmul.mubr.bf16.gmra.mrb[0].mxu0 %v181
    %v367 = vpop.f32.mrb[0].mxu0
    %v368 = vadd.f32 0.0, %v367
    %v369 = vpop.f32.mrb[0].mxu0
    %v370 = vpop.f32.mrb[0].mxu0
    %v371 = vadd.f32 0.0, %v370
    %v372 = vpop.f32.mrb[0].mxu0
    %373 = vmatprep.mubr.bf16.mxu0 %v184
    %374 = vmatmul.mubr.bf16.gmra.mrb[0].mxu0 %v183
    %v375 = vpop.f32.mrb[0].mxu0
    %v376 = vadd.f32 0.0, %v375
    %v377 = vpop.f32.mrb[0].mxu0
    %v378 = vpop.f32.mrb[0].mxu0
    %v379 = vadd.f32 0.0, %v378
    %v380 = vpop.f32.mrb[0].mxu0
    %381 = vmatprep.mubr.bf16.mxu0 %v186
    %382 = vmatmul.mubr.bf16.gmra.mrb[0].mxu0 %v185
    %v383 = vpop.f32.mrb[0].mxu0
    %v384 = vadd.f32 0.0, %v383
    %v385 = vpop.f32.mrb[0].mxu0
    %v386 = vpop.f32.mrb[0].mxu0
    %v387 = vadd.f32 0.0, %v386
    %v388 = vpop.f32.mrb[0].mxu0
    %389 = vmatprep.mubr.bf16.mxu0 %v188
    %390 = vmatmul.mubr.bf16.gmra.mrb[0].mxu0 %v187
    %v391 = vpop.f32.mrb[0].mxu0
    %v392 = vadd.f32 0.0, %v391
    %v393 = vpop.f32.mrb[0].mxu0
    %v394 = vpop.f32.mrb[0].mxu0
    %v395 = vadd.f32 0.0, %v394
    %v396 = vpop.f32.mrb[0].mxu0
    %397 = vdwg.mxu0
    %v398 = vmul.f32 %v336, 0.5
    %v399 = vmul.f32 %v339, 0.5
    %v400 = vmul.f32 %v344, 0.5
    %v401 = vmul.f32 %v347, 0.5
    %v402 = vmul.f32 %v352, 0.5
    %v403 = vmul.f32 %v355, 0.5
    %v404 = vmul.f32 %v360, 0.5
    %v405 = vmul.f32 %v363, 0.5
    %v406 = vmul.f32 %v368, 0.5
    %v407 = vmul.f32 %v371, 0.5
    %v408 = vmul.f32 %v376, 0.5
    %v409 = vmul.f32 %v379, 0.5
    %v410 = vmul.f32 %v384, 0.5
    %v411 = vmul.f32 %v387, 0.5
    %v412 = vmul.f32 %v392, 0.5
    %v413 = vmul.f32 %v395, 0.5
    %v414 = vmul.f32 %v336, 0.044715
    %v415 = vmul.f32 %v339, 0.044715
    %v416 = vmul.f32 %v344, 0.044715
    %v417 = vmul.f32 %v347, 0.044715
    %v418 = vmul.f32 %v352, 0.044715
    %v419 = vmul.f32 %v355, 0.044715
    %v420 = vmul.f32 %v360, 0.044715
    %v421 = vmul.f32 %v363, 0.044715
    %v422 = vmul.f32 %v368, 0.044715
    %v423 = vmul.f32 %v371, 0.044715
    %v424 = vmul.f32 %v376, 0.044715
    %v425 = vmul.f32 %v379, 0.044715
    %v426 = vmul.f32 %v384, 0.044715
    %v427 = vmul.f32 %v387, 0.044715
    %v428 = vmul.f32 %v392, 0.044715
    %v429 = vmul.f32 %v395, 0.044715
    %v430 = vmul.f32 %v414, %v336
    %v431 = vmul.f32 %v415, %v339
    %v432 = vmul.f32 %v416, %v344
    %v433 = vmul.f32 %v417, %v347
    %v434 = vmul.f32 %v418, %v352
    %v435 = vmul.f32 %v419, %v355
    %v436 = vmul.f32 %v420, %v360
    %v437 = vmul.f32 %v421, %v363
    %v438 = vmul.f32 %v422, %v368
    %v439 = vmul.f32 %v423, %v371
    %v440 = vmul.f32 %v424, %v376
    %v441 = vmul.f32 %v425, %v379
    %v442 = vmul.f32 %v426, %v384
    %v443 = vmul.f32 %v427, %v387
    %v444 = vmul.f32 %v428, %v392
    %v445 = vmul.f32 %v429, %v395
    %v446 = vmul.f32 %v430, %v336
    %v447 = vmul.f32 %v431, %v339
    %v448 = vmul.f32 %v432, %v344
    %v449 = vmul.f32 %v433, %v347
    %v450 = vmul.f32 %v434, %v352
    %v451 = vmul.f32 %v435, %v355
    %v452 = vmul.f32 %v436, %v360
    %v453 = vmul.f32 %v437, %v363
    %v454 = vmul.f32 %v438, %v368
    %v455 = vmul.f32 %v439, %v371
    %v456 = vmul.f32 %v440, %v376
    %v457 = vmul.f32 %v441, %v379
    %v458 = vmul.f32 %v442, %v384
    %v459 = vmul.f32 %v443, %v387
    %v460 = vmul.f32 %v444, %v392
    %v461 = vmul.f32 %v445, %v395
    %v462 = vadd.f32 %v336, %v446
    %v463 = vadd.f32 %v339, %v447
    %v464 = vadd.f32 %v344, %v448
    %v465 = vadd.f32 %v347, %v449
    %v466 = vadd.f32 %v352, %v450
    %v467 = vadd.f32 %v355, %v451
    %v468 = vadd.f32 %v360, %v452
    %v469 = vadd.f32 %v363, %v453
    %v470 = vadd.f32 %v368, %v454
    %v471 = vadd.f32 %v371, %v455
    %v472 = vadd.f32 %v376, %v456
    %v473 = vadd.f32 %v379, %v457
    %v474 = vadd.f32 %v384, %v458
    %v475 = vadd.f32 %v387, %v459
    %v476 = vadd.f32 %v392, %v460
    %v477 = vadd.f32 %v395, %v461
    %v478 = vmul.f32 %v462, 0.7978846
    %v479 = vmul.f32 %v463, 0.7978846
    %v480 = vmul.f32 %v464, 0.7978846
    %v481 = vmul.f32 %v465, 0.7978846
    %v482 = vmul.f32 %v466, 0.7978846
    %v483 = vmul.f32 %v467, 0.7978846
    %v484 = vmul.f32 %v468, 0.7978846
    %v485 = vmul.f32 %v469, 0.7978846
    %v486 = vmul.f32 %v470, 0.7978846
    %v487 = vmul.f32 %v471, 0.7978846
    %v488 = vmul.f32 %v472, 0.7978846
    %v489 = vmul.f32 %v473, 0.7978846
    %v490 = vmul.f32 %v474, 0.7978846
    %v491 = vmul.f32 %v475, 0.7978846
    %v492 = vmul.f32 %v476, 0.7978846
    %v493 = vmul.f32 %v477, 0.7978846
    %v494 = vtanh.pop %v478
    %v495 = vtanh.pop %v479
    %v496 = vtanh.pop %v480
    %v497 = vtanh.pop %v481
    %v498 = vtanh.pop %v482
    %v499 = vtanh.pop %v483
    %v500 = vtanh.pop %v484
    %v501 = vtanh.pop %v485
    %v502 = vtanh.pop %v486
    %v503 = vtanh.pop %v487
    %v504 = vtanh.pop %v488
    %v505 = vtanh.pop %v489
    %v506 = vtanh.pop %v490
    %v507 = vtanh.pop %v491
    %v508 = vtanh.pop %v492
    %v509 = vtanh.pop %v493
    %v510 = vadd.f32 %v494, 1.0
    %v511 = vadd.f32 %v495, 1.0
    %v512 = vadd.f32 %v496, 1.0
    %v513 = vadd.f32 %v497, 1.0
    %v514 = vadd.f32 %v498, 1.0
    %v515 = vadd.f32 %v499, 1.0
    %v516 = vadd.f32 %v500, 1.0
    %v517 = vadd.f32 %v501, 1.0
    %v518 = vadd.f32 %v502, 1.0
    %v519 = vadd.f32 %v503, 1.0
    %v520 = vadd.f32 %v504, 1.0
    %v521 = vadd.f32 %v505, 1.0
    %v522 = vadd.f32 %v506, 1.0
    %v523 = vadd.f32 %v507, 1.0
    %v524 = vadd.f32 %v508, 1.0
    %v525 = vadd.f32 %v509, 1.0
    %v526 = vmul.f32 %v398, %v510
    %v527 = vmul.f32 %v399, %v511
    %v528 = vmul.f32 %v400, %v512
    %v529 = vmul.f32 %v401, %v513
    %v530 = vmul.f32 %v402, %v514
    %v531 = vmul.f32 %v403, %v515
    %v532 = vmul.f32 %v404, %v516
    %v533 = vmul.f32 %v405, %v517
    %v534 = vmul.f32 %v406, %v518
    %v535 = vmul.f32 %v407, %v519
    %v536 = vmul.f32 %v408, %v520
    %v537 = vmul.f32 %v409, %v521
    %v538 = vmul.f32 %v410, %v522
    %v539 = vmul.f32 %v411, %v523
    %v540 = vmul.f32 %v412, %v524
    %v541 = vmul.f32 %v413, %v525
    %v542 = vpack.c.bf16 %v527, %v526
    %v543 = vpack.c.bf16 %v529, %v528
    %v544 = vpack.c.bf16 %v531, %v530
    %v545 = vpack.c.bf16 %v533, %v532
    %v546 = vpack.c.bf16 %v535, %v534
    %v547 = vpack.c.bf16 %v537, %v536
    %v548 = vpack.c.bf16 %v539, %v538
    %v549 = vpack.c.bf16 %v541, %v540
    %v550 = vld [vmem:[#allocation7] sm:$0xf]
    %v551 = vld [vmem:[#allocation7 + $0x4] sm:$0xf]
    %v552 = vld [vmem:[#allocation7 + $0x8] sm:$0xf]
    %v553 = vld [vmem:[#allocation7 + $0xc] sm:$0xf]
    %v554 = vld [vmem:[#allocation7 + $0x10] sm:$0xf]
    %v555 = vld [vmem:[#allocation7 + $0x14] sm:$0xf]
    %v556 = vld [vmem:[#allocation7 + $0x18] sm:$0xf]
    %v557 = vld [vmem:[#allocation7 + $0x1c] sm:$0xf]
    %v558 = vld [vmem:[#allocation7 + $0x20] sm:$0xf]
    %v559 = vld [vmem:[#allocation7 + $0x24] sm:$0xf]
    %v560 = vld [vmem:[#allocation7 + $0x28] sm:$0xf]
    %v561 = vld [vmem:[#allocation7 + $0x2c] sm:$0xf]
    %v562 = vld [vmem:[#allocation7 + $0x30] sm:$0xf]
    %v563 = vld [vmem:[#allocation7 + $0x34] sm:$0xf]
    %v564 = vld [vmem:[#allocation7 + $0x38] sm:$0xf]
    %v565 = vld [vmem:[#allocation7 + $0x3c] sm:$0xf]
    %v582 = vunpack.c.l.b16 %v550
    %v583 = vunpack.c.l.b16 %v551
    %v584 = vunpack.c.l.b16 %v552
    %v585 = vunpack.c.l.b16 %v553
    %v586 = vunpack.c.l.b16 %v554
    %v587 = vunpack.c.l.b16 %v555
    %v588 = vunpack.c.l.b16 %v556
    %v589 = vunpack.c.l.b16 %v557
    %v590 = vunpack.c.l.b16 %v558
    %v591 = vunpack.c.l.b16 %v559
    %v592 = vunpack.c.l.b16 %v560
    %v593 = vunpack.c.l.b16 %v561
    %v594 = vunpack.c.l.b16 %v562
    %v595 = vunpack.c.l.b16 %v563
    %v596 = vunpack.c.l.b16 %v564
    %v597 = vunpack.c.l.b16 %v565
    %v598 = vpack.c.b16 %v583, %v582
    %v599 = vpack.c.b16 %v585, %v584
    %v600 = vpack.c.b16 %v587, %v586
    %v601 = vpack.c.b16 %v589, %v588
    %v602 = vpack.c.b16 %v591, %v590
    %v603 = vpack.c.b16 %v593, %v592
    %v604 = vpack.c.b16 %v595, %v594
    %v605 = vpack.c.b16 %v597, %v596
    %614 = vmatprep.subr.bf16.mxu0 0
    %615 = vmatpush1.bf16.msra.mxu0 %v598
    %616 = vmatprep.subr.bf16.mxu0 0
    %617 = vmatpush1.bf16.msra.mxu0 %v599
    %618 = vmatprep.subr.bf16.mxu0 0
    %619 = vmatpush1.bf16.msra.mxu0 %v600
    %620 = vmatprep.subr.bf16.mxu0 0
    %621 = vmatpush1.bf16.msra.mxu0 %v601
    %622 = vmatprep.subr.bf16.mxu0 0
    %623 = vmatpush1.bf16.msra.mxu0 %v602
    %624 = vmatprep.subr.bf16.mxu0 0
    %625 = vmatpush1.bf16.msra.mxu0 %v603
    %626 = vmatprep.subr.bf16.mxu0 0
    %627 = vmatpush1.bf16.msra.mxu0 %v604
    %628 = vmatprep.subr.bf16.mxu0 0
    %629 = vmatpush1.bf16.msra.mxu0 %v605
    %630 = vmatprep.subr.bf16.mxu0 0
    %631 = vmatpush1.bf16.msra.mxu0 0
    %632 = vmatprep.subr.bf16.mxu0 0
    %633 = vmatpush1.bf16.msra.mxu0 0
    %634 = vmatprep.subr.bf16.mxu0 0
    %635 = vmatpush1.bf16.msra.mxu0 0
    %636 = vmatprep.subr.bf16.mxu0 0
    %637 = vmatpush1.bf16.msra.mxu0 0
    %638 = vmatprep.subr.bf16.mxu0 0
    %639 = vmatpush1.bf16.msra.mxu0 0
    %640 = vmatprep.subr.bf16.mxu0 0
    %641 = vmatpush1.bf16.msra.mxu0 0
    %642 = vmatprep.subr.bf16.mxu0 0
    %643 = vmatpush1.bf16.msra.mxu0 0
    %644 = vmatprep.subr.bf16.mxu0 0
    %645 = vmatpush1.bf16.msra.mxu0 0
    %646 = vmatprep.mubr.bf16.mxu0 0
    %647 = vmatmul.mubr.bf16.gmra.mrb[0].mxu0 %v542
    %v648 = vpop.f32.mrb[0].mxu0
    %v649 = vadd.f32 0.0, %v648
    %v650 = vpop.f32.mrb[0].mxu0
    %v651 = vpop.f32.mrb[0].mxu0
    %v652 = vadd.f32 0.0, %v651
    %v653 = vpop.f32.mrb[0].mxu0
    %654 = vmatprep.mubr.bf16.mxu0 0
    %655 = vmatmul.mubr.bf16.gmra.mrb[0].mxu0 %v543
    %v656 = vpop.f32.mrb[0].mxu0
    %v657 = vadd.f32 0.0, %v656
    %v658 = vpop.f32.mrb[0].mxu0
    %v659 = vpop.f32.mrb[0].mxu0
    %v660 = vadd.f32 0.0, %v659
    %v661 = vpop.f32.mrb[0].mxu0
    %662 = vmatprep.mubr.bf16.mxu0 0
    %663 = vmatmul.mubr.bf16.gmra.mrb[0].mxu0 %v544
    %v664 = vpop.f32.mrb[0].mxu0
    %v665 = vadd.f32 0.0, %v664
    %v666 = vpop.f32.mrb[0].mxu0
    %v667 = vpop.f32.mrb[0].mxu0
    %v668 = vadd.f32 0.0, %v667
    %v669 = vpop.f32.mrb[0].mxu0
    %670 = vmatprep.mubr.bf16.mxu0 0
    %671 = vmatmul.mubr.bf16.gmra.mrb[0].mxu0 %v545
    %v672 = vpop.f32.mrb[0].mxu0
    %v673 = vadd.f32 0.0, %v672
    %v674 = vpop.f32.mrb[0].mxu0
    %v675 = vpop.f32.mrb[0].mxu0
    %v676 = vadd.f32 0.0, %v675
    %v677 = vpop.f32.mrb[0].mxu0
    %678 = vmatprep.mubr.bf16.mxu0 0
    %679 = vmatmul.mubr.bf16.gmra.mrb[0].mxu0 %v546
    %v680 = vpop.f32.mrb[0].mxu0
    %v681 = vadd.f32 0.0, %v680
    %v682 = vpop.f32.mrb[0].mxu0
    %v683 = vpop.f32.mrb[0].mxu0
    %v684 = vadd.f32 0.0, %v683
    %v685 = vpop.f32.mrb[0].mxu0
    %686 = vmatprep.mubr.bf16.mxu0 0
    %687 = vmatmul.mubr.bf16.gmra.mrb[0].mxu0 %v547
    %v688 = vpop.f32.mrb[0].mxu0
    %v689 = vadd.f32 0.0, %v688
    %v690 = vpop.f32.mrb[0].mxu0
    %v691 = vpop.f32.mrb[0].mxu0
    %v692 = vadd.f32 0.0, %v691
    %v693 = vpop.f32.mrb[0].mxu0
    %694 = vmatprep.mubr.bf16.mxu0 0
    %695 = vmatmul.mubr.bf16.gmra.mrb[0].mxu0 %v548
    %v696 = vpop.f32.mrb[0].mxu0
    %v697 = vadd.f32 0.0, %v696
    %v698 = vpop.f32.mrb[0].mxu0
    %v699 = vpop.f32.mrb[0].mxu0
    %v700 = vadd.f32 0.0, %v699
    %v701 = vpop.f32.mrb[0].mxu0
    %702 = vmatprep.mubr.bf16.mxu0 0
    %703 = vmatmul.mubr.bf16.gmra.mrb[0].mxu0 %v549
    %v704 = vpop.f32.mrb[0].mxu0
    %v705 = vadd.f32 0.0, %v704
    %v706 = vpop.f32.mrb[0].mxu0
    %v707 = vpop.f32.mrb[0].mxu0
    %v708 = vadd.f32 0.0, %v707
    %v709 = vpop.f32.mrb[0].mxu0
    %710 = vdwg.mxu0
    %v711 = vmul.f32 %v649, 0.5
    %v712 = vmul.f32 %v652, 0.5
    %v713 = vmul.f32 %v657, 0.5
    %v714 = vmul.f32 %v660, 0.5
    %v715 = vmul.f32 %v665, 0.5
    %v716 = vmul.f32 %v668, 0.5
    %v717 = vmul.f32 %v673, 0.5
    %v718 = vmul.f32 %v676, 0.5
    %v719 = vmul.f32 %v681, 0.5
    %v720 = vmul.f32 %v684, 0.5
    %v721 = vmul.f32 %v689, 0.5
    %v722 = vmul.f32 %v692, 0.5
    %v723 = vmul.f32 %v697, 0.5
    %v724 = vmul.f32 %v700, 0.5
    %v725 = vmul.f32 %v705, 0.5
    %v726 = vmul.f32 %v708, 0.5
    %v727 = vmul.f32 %v649, 0.044715
    %v728 = vmul.f32 %v652, 0.044715
    %v729 = vmul.f32 %v657, 0.044715
    %v730 = vmul.f32 %v660, 0.044715
    %v731 = vmul.f32 %v665, 0.044715
    %v732 = vmul.f32 %v668, 0.044715
    %v733 = vmul.f32 %v673, 0.044715
    %v734 = vmul.f32 %v676, 0.044715
    %v735 = vmul.f32 %v681, 0.044715
    %v736 = vmul.f32 %v684, 0.044715
    %v737 = vmul.f32 %v689, 0.044715
    %v738 = vmul.f32 %v692, 0.044715
    %v739 = vmul.f32 %v697, 0.044715
    %v740 = vmul.f32 %v700, 0.044715
    %v741 = vmul.f32 %v705, 0.044715
    %v742 = vmul.f32 %v708, 0.044715
    %v743 = vmul.f32 %v727, %v649
    %v744 = vmul.f32 %v728, %v652
    %v745 = vmul.f32 %v729, %v657
    %v746 = vmul.f32 %v730, %v660
    %v747 = vmul.f32 %v731, %v665
    %v748 = vmul.f32 %v732, %v668
    %v749 = vmul.f32 %v733, %v673
    %v750 = vmul.f32 %v734, %v676
    %v751 = vmul.f32 %v735, %v681
    %v752 = vmul.f32 %v736, %v684
    %v753 = vmul.f32 %v737, %v689
    %v754 = vmul.f32 %v738, %v692
    %v755 = vmul.f32 %v739, %v697
    %v756 = vmul.f32 %v740, %v700
    %v757 = vmul.f32 %v741, %v705
    %v758 = vmul.f32 %v742, %v708
    %v759 = vmul.f32 %v743, %v649
    %v760 = vmul.f32 %v744, %v652
    %v761 = vmul.f32 %v745, %v657
    %v762 = vmul.f32 %v746, %v660
    %v763 = vmul.f32 %v747, %v665
    %v764 = vmul.f32 %v748, %v668
    %v765 = vmul.f32 %v749, %v673
    %v766 = vmul.f32 %v750, %v676
    %v767 = vmul.f32 %v751, %v681
    %v768 = vmul.f32 %v752, %v684
    %v769 = vmul.f32 %v753, %v689
    %v770 = vmul.f32 %v754, %v692
    %v771 = vmul.f32 %v755, %v697
    %v772 = vmul.f32 %v756, %v700
    %v773 = vmul.f32 %v757, %v705
    %v774 = vmul.f32 %v758, %v708
    %v775 = vadd.f32 %v649, %v759
    %v776 = vadd.f32 %v652, %v760
    %v777 = vadd.f32 %v657, %v761
    %v778 = vadd.f32 %v660, %v762
    %v779 = vadd.f32 %v665, %v763
    %v780 = vadd.f32 %v668, %v764
    %v781 = vadd.f32 %v673, %v765
    %v782 = vadd.f32 %v676, %v766
    %v783 = vadd.f32 %v681, %v767
    %v784 = vadd.f32 %v684, %v768
    %v785 = vadd.f32 %v689, %v769
    %v786 = vadd.f32 %v692, %v770
    %v787 = vadd.f32 %v697, %v771
    %v788 = vadd.f32 %v700, %v772
    %v789 = vadd.f32 %v705, %v773
    %v790 = vadd.f32 %v708, %v774
    %v791 = vmul.f32 %v775, 0.7978846
    %v792 = vmul.f32 %v776, 0.7978846
    %v793 = vmul.f32 %v777, 0.7978846
    %v794 = vmul.f32 %v778, 0.7978846
    %v795 = vmul.f32 %v779, 0.7978846
    %v796 = vmul.f32 %v780, 0.7978846
    %v797 = vmul.f32 %v781, 0.7978846
    %v798 = vmul.f32 %v782, 0.7978846
    %v799 = vmul.f32 %v783, 0.7978846
    %v800 = vmul.f32 %v784, 0.7978846
    %v801 = vmul.f32 %v785, 0.7978846
    %v802 = vmul.f32 %v786, 0.7978846
    %v803 = vmul.f32 %v787, 0.7978846
    %v804 = vmul.f32 %v788, 0.7978846
    %v805 = vmul.f32 %v789, 0.7978846
    %v806 = vmul.f32 %v790, 0.7978846
    %v807 = vtanh.pop %v791
    %v808 = vtanh.pop %v792
    %v809 = vtanh.pop %v793
    %v810 = vtanh.pop %v794
    %v811 = vtanh.pop %v795
    %v812 = vtanh.pop %v796
    %v813 = vtanh.pop %v797
    %v814 = vtanh.pop %v798
    %v815 = vtanh.pop %v799
    %v816 = vtanh.pop %v800
    %v817 = vtanh.pop %v801
    %v818 = vtanh.pop %v802
    %v819 = vtanh.pop %v803
    %v820 = vtanh.pop %v804
    %v821 = vtanh.pop %v805
    %v822 = vtanh.pop %v806
    %v823 = vadd.f32 %v807, 1.0
    %v824 = vadd.f32 %v808, 1.0
    %v825 = vadd.f32 %v809, 1.0
    %v826 = vadd.f32 %v810, 1.0
    %v827 = vadd.f32 %v811, 1.0
    %v828 = vadd.f32 %v812, 1.0
    %v829 = vadd.f32 %v813, 1.0
    %v830 = vadd.f32 %v814, 1.0
    %v831 = vadd.f32 %v815, 1.0
    %v832 = vadd.f32 %v816, 1.0
    %v833 = vadd.f32 %v817, 1.0
    %v834 = vadd.f32 %v818, 1.0
    %v835 = vadd.f32 %v819, 1.0
    %v836 = vadd.f32 %v820, 1.0
    %v837 = vadd.f32 %v821, 1.0
    %v838 = vadd.f32 %v822, 1.0
    %v839 = vmul.f32 %v711, %v823
    %v840 = vmul.f32 %v712, %v824
    %v841 = vmul.f32 %v713, %v825
    %v842 = vmul.f32 %v714, %v826
    %v843 = vmul.f32 %v715, %v827
    %v844 = vmul.f32 %v716, %v828
    %v845 = vmul.f32 %v717, %v829
    %v846 = vmul.f32 %v718, %v830
    %v847 = vmul.f32 %v719, %v831
    %v848 = vmul.f32 %v720, %v832
    %v849 = vmul.f32 %v721, %v833
    %v850 = vmul.f32 %v722, %v834
    %v851 = vmul.f32 %v723, %v835
    %v852 = vmul.f32 %v724, %v836
    %v853 = vmul.f32 %v725, %v837
    %v854 = vmul.f32 %v726, %v838
    %v855 = vpack.c.bf16 %v840, %v839
    %v856 = vpack.c.bf16 %v842, %v841
    %v857 = vpack.c.bf16 %v844, %v843
    %v858 = vpack.c.bf16 %v846, %v845
    %v859 = vpack.c.bf16 %v848, %v847
    %v860 = vpack.c.bf16 %v850, %v849
    %v861 = vpack.c.bf16 %v852, %v851
    %v862 = vpack.c.bf16 %v854, %v853
    %v863 = vld [vmem:[#allocation8] sm:$0xf]
    %v864 = vld [vmem:[#allocation8 + $0x4] sm:$0xf]
    %v865 = vld [vmem:[#allocation8 + $0x8] sm:$0xf]
    %v866 = vld [vmem:[#allocation8 + $0xc] sm:$0xf]
    %v867 = vld [vmem:[#allocation8 + $0x10] sm:$0xf]
    %v868 = vld [vmem:[#allocation8 + $0x14] sm:$0xf]
    %v869 = vld [vmem:[#allocation8 + $0x18] sm:$0xf]
    %v870 = vld [vmem:[#allocation8 + $0x1c] sm:$0xf]
    %v871 = vld [vmem:[#allocation8 + $0x20] sm:$0xf]
    %v872 = vld [vmem:[#allocation8 + $0x24] sm:$0xf]
    %v873 = vld [vmem:[#allocation8 + $0x28] sm:$0xf]
    %v874 = vld [vmem:[#allocation8 + $0x2c] sm:$0xf]
    %v875 = vld [vmem:[#allocation8 + $0x30] sm:$0xf]
    %v876 = vld [vmem:[#allocation8 + $0x34] sm:$0xf]
    %v877 = vld [vmem:[#allocation8 + $0x38] sm:$0xf]
    %v878 = vld [vmem:[#allocation8 + $0x3c] sm:$0xf]
    %v879 = vld [vmem:[%s4] sm:$0x1]
    %v881 = vlaneseq
    %v882 = vshrl.u32 %v881, 7
    %v883 = vsub.s32 0, %v882
    %v884 = vrot.slane %v879, %v883
    %v902 = vunpack.c.l.b16 %v863
    %v903 = vunpack.c.l.b16 %v864
    %v904 = vunpack.c.l.b16 %v865
    %v905 = vunpack.c.l.b16 %v866
    %v906 = vunpack.c.l.b16 %v867
    %v907 = vunpack.c.l.b16 %v868
    %v908 = vunpack.c.l.b16 %v869
    %v909 = vunpack.c.l.b16 %v870
    %v910 = vunpack.c.l.b16 %v871
    %v911 = vunpack.c.l.b16 %v872
    %v912 = vunpack.c.l.b16 %v873
    %v913 = vunpack.c.l.b16 %v874
    %v914 = vunpack.c.l.b16 %v875
    %v915 = vunpack.c.l.b16 %v876
    %v916 = vunpack.c.l.b16 %v877
    %v917 = vunpack.c.l.b16 %v878
    %v918 = vpack.c.b16 %v903, %v902
    %v919 = vpack.c.b16 %v905, %v904
    %v920 = vpack.c.b16 %v907, %v906
    %v921 = vpack.c.b16 %v909, %v908
    %v922 = vpack.c.b16 %v911, %v910
    %v923 = vpack.c.b16 %v913, %v912
    %v924 = vpack.c.b16 %v915, %v914
    %v925 = vpack.c.b16 %v917, %v916
    %934 = vmatprep.subr.bf16.mxu0 0
    %935 = vmatpush1.bf16.msra.mxu0 %v918
    %936 = vmatprep.subr.bf16.mxu0 0
    %937 = vmatpush1.bf16.msra.mxu0 %v919
    %938 = vmatprep.subr.bf16.mxu0 0
    %939 = vmatpush1.bf16.msra.mxu0 %v920
    %940 = vmatprep.subr.bf16.mxu0 0
    %941 = vmatpush1.bf16.msra.mxu0 %v921
    %942 = vmatprep.subr.bf16.mxu0 0
    %943 = vmatpush1.bf16.msra.mxu0 %v922
    %944 = vmatprep.subr.bf16.mxu0 0
    %945 = vmatpush1.bf16.msra.mxu0 %v923
    %946 = vmatprep.subr.bf16.mxu0 0
    %947 = vmatpush1.bf16.msra.mxu0 %v924
    %948 = vmatprep.subr.bf16.mxu0 0
    %949 = vmatpush1.bf16.msra.mxu0 %v925
    %950 = vmatprep.subr.bf16.mxu0 0
    %951 = vmatpush1.bf16.msra.mxu0 0
    %952 = vmatprep.subr.bf16.mxu0 0
    %953 = vmatpush1.bf16.msra.mxu0 0
    %954 = vmatprep.subr.bf16.mxu0 0
    %955 = vmatpush1.bf16.msra.mxu0 0
    %956 = vmatprep.subr.bf16.mxu0 0
    %957 = vmatpush1.bf16.msra.mxu0 0
    %958 = vmatprep.subr.bf16.mxu0 0
    %959 = vmatpush1.bf16.msra.mxu0 0
    %960 = vmatprep.subr.bf16.mxu0 0
    %961 = vmatpush1.bf16.msra.mxu0 0
    %962 = vmatprep.subr.bf16.mxu0 0
    %963 = vmatpush1.bf16.msra.mxu0 0
    %964 = vmatprep.subr.bf16.mxu0 0
    %965 = vmatpush1.bf16.msra.mxu0 0
    %966 = vmatprep.mubr.bf16.mxu0 0
    %967 = vmatmul.mubr.bf16.gmra.mrb[0].mxu0 %v855
    %v968 = vpop.f32.mrb[0].mxu0
    %v969 = vadd.f32 %v884, %v968
    %v970 = vpop.f32.mrb[0].mxu0
    %v971 = vpop.f32.mrb[0].mxu0
    %v972 = vadd.f32 %v884, %v971
    %v973 = vpop.f32.mrb[0].mxu0
    %974 = vmatprep.mubr.bf16.mxu0 0
    %975 = vmatmul.mubr.bf16.gmra.mrb[0].mxu0 %v856
    %v976 = vpop.f32.mrb[0].mxu0
    %v977 = vadd.f32 %v884, %v976
    %v978 = vpop.f32.mrb[0].mxu0
    %v979 = vpop.f32.mrb[0].mxu0
    %v980 = vadd.f32 %v884, %v979
    %v981 = vpop.f32.mrb[0].mxu0
    %982 = vmatprep.mubr.bf16.mxu0 0
    %983 = vmatmul.mubr.bf16.gmra.mrb[0].mxu0 %v857
    %v984 = vpop.f32.mrb[0].mxu0
    %v985 = vadd.f32 %v884, %v984
    %v986 = vpop.f32.mrb[0].mxu0
    %v987 = vpop.f32.mrb[0].mxu0
    %v988 = vadd.f32 %v884, %v987
    %v989 = vpop.f32.mrb[0].mxu0
    %990 = vmatprep.mubr.bf16.mxu0 0
    %991 = vmatmul.mubr.bf16.gmra.mrb[0].mxu0 %v858
    %v992 = vpop.f32.mrb[0].mxu0
    %v993 = vadd.f32 %v884, %v992
    %v994 = vpop.f32.mrb[0].mxu0
    %v995 = vpop.f32.mrb[0].mxu0
    %v996 = vadd.f32 %v884, %v995
    %v997 = vpop.f32.mrb[0].mxu0
    %998 = vmatprep.mubr.bf16.mxu0 0
    %999 = vmatmul.mubr.bf16.gmra.mrb[0].mxu0 %v859
    %v1000 = vpop.f32.mrb[0].mxu0
    %v1001 = vadd.f32 %v884, %v1000
    %v1002 = vpop.f32.mrb[0].mxu0
    %v1003 = vpop.f32.mrb[0].mxu0
    %v1004 = vadd.f32 %v884, %v1003
    %v1005 = vpop.f32.mrb[0].mxu0
    %1006 = vmatprep.mubr.bf16.mxu0 0
    %1007 = vmatmul.mubr.bf16.gmra.mrb[0].mxu0 %v860
    %v1008 = vpop.f32.mrb[0].mxu0
    %v1009 = vadd.f32 %v884, %v1008
    %v1010 = vpop.f32.mrb[0].mxu0
    %v1011 = vpop.f32.mrb[0].mxu0
    %v1012 = vadd.f32 %v884, %v1011
    %v1013 = vpop.f32.mrb[0].mxu0
    %1014 = vmatprep.mubr.bf16.mxu0 0
    %1015 = vmatmul.mubr.bf16.gmra.mrb[0].mxu0 %v861
    %v1016 = vpop.f32.mrb[0].mxu0
    %v1017 = vadd.f32 %v884, %v1016
    %v1018 = vpop.f32.mrb[0].mxu0
    %v1019 = vpop.f32.mrb[0].mxu0
    %v1020 = vadd.f32 %v884, %v1019
    %v1021 = vpop.f32.mrb[0].mxu0
    %1022 = vmatprep.mubr.bf16.mxu0 0
    %1023 = vmatmul.mubr.bf16.gmra.mrb[0].mxu0 %v862
    %v1024 = vpop.f32.mrb[0].mxu0
    %v1025 = vadd.f32 %v884, %v1024
    %v1026 = vpop.f32.mrb[0].mxu0
    %v1027 = vpop.f32.mrb[0].mxu0
    %v1028 = vadd.f32 %v884, %v1027
    %v1029 = vpop.f32.mrb[0].mxu0
    %1030 = vdwg.mxu0
    %v1031 = vlaneseq
    %v1032 = vand.u32 %v1031, 127
    %vm1033 = vcmp.ge.s32.totalorder %v1032, 64
    %vm1034 = vcmp.lt.s32.totalorder %v1032, 74
    %vm1035 = vmand %vm1033, %vm1034
    %vm1036 = vcmp.ge.s32.totalorder %v1032, 74
    %vm1037 = vcmp.lt.s32.totalorder %v1032, 84
    %vm1038 = vmand %vm1036, %vm1037
    %v1039 = vsel %vm1035, %v969, -1e+30
    %v1040 = vsel %vm1035, %v972, -1e+30
    %v1041 = vsel %vm1035, %v977, -1e+30
    %v1042 = vsel %vm1035, %v980, -1e+30
    %v1043 = vsel %vm1035, %v985, -1e+30
    %v1044 = vsel %vm1035, %v988, -1e+30
    %v1045 = vsel %vm1035, %v993, -1e+30
    %v1046 = vsel %vm1035, %v996, -1e+30
    %v1047 = vsel %vm1035, %v1001, -1e+30
    %v1048 = vsel %vm1035, %v1004, -1e+30
    %v1049 = vsel %vm1035, %v1009, -1e+30
    %v1050 = vsel %vm1035, %v1012, -1e+30
    %v1051 = vsel %vm1035, %v1017, -1e+30
    %v1052 = vsel %vm1035, %v1020, -1e+30
    %v1053 = vsel %vm1035, %v1025, -1e+30
    %v1054 = vsel %vm1035, %v1028, -1e+30
    %1055 = vmax.xlane.f32.xlu0 %v1039
    %v1056 = vpop.xlane.xlu0 %1055
    %1057 = vmax.xlane.f32.xlu0 %v1040
    %v1058 = vpop.xlane.xlu0 %1057
    %1059 = vmax.xlane.f32.xlu0 %v1041
    %v1060 = vpop.xlane.xlu0 %1059
    %1061 = vmax.xlane.f32.xlu0 %v1042
    %v1062 = vpop.xlane.xlu0 %1061
    %1063 = vmax.xlane.f32.xlu0 %v1043
    %v1064 = vpop.xlane.xlu0 %1063
    %1065 = vmax.xlane.f32.xlu0 %v1044
    %v1066 = vpop.xlane.xlu0 %1065
    %1067 = vmax.xlane.f32.xlu0 %v1045
    %v1068 = vpop.xlane.xlu0 %1067
    %1069 = vmax.xlane.f32.xlu0 %v1046
    %v1070 = vpop.xlane.xlu0 %1069
    %1071 = vmax.xlane.f32.xlu0 %v1047
    %v1072 = vpop.xlane.xlu0 %1071
    %1073 = vmax.xlane.f32.xlu0 %v1048
    %v1074 = vpop.xlane.xlu0 %1073
    %1075 = vmax.xlane.f32.xlu0 %v1049
    %v1076 = vpop.xlane.xlu0 %1075
    %1077 = vmax.xlane.f32.xlu0 %v1050
    %v1078 = vpop.xlane.xlu0 %1077
    %1079 = vmax.xlane.f32.xlu0 %v1051
    %v1080 = vpop.xlane.xlu0 %1079
    %1081 = vmax.xlane.f32.xlu0 %v1052
    %v1082 = vpop.xlane.xlu0 %1081
    %1083 = vmax.xlane.f32.xlu0 %v1053
    %v1084 = vpop.xlane.xlu0 %1083
    %1085 = vmax.xlane.f32.xlu0 %v1054
    %v1086 = vpop.xlane.xlu0 %1085
    %v1087 = vsub.f32 %v1039, %v1056
    %v1088 = vsub.f32 %v1040, %v1058
    %v1089 = vsub.f32 %v1041, %v1060
    %v1090 = vsub.f32 %v1042, %v1062
    %v1091 = vsub.f32 %v1043, %v1064
    %v1092 = vsub.f32 %v1044, %v1066
    %v1093 = vsub.f32 %v1045, %v1068
    %v1094 = vsub.f32 %v1046, %v1070
    %v1095 = vsub.f32 %v1047, %v1072
    %v1096 = vsub.f32 %v1048, %v1074
    %v1097 = vsub.f32 %v1049, %v1076
    %v1098 = vsub.f32 %v1050, %v1078
    %v1099 = vsub.f32 %v1051, %v1080
    %v1100 = vsub.f32 %v1052, %v1082
    %v1101 = vsub.f32 %v1053, %v1084
    %v1102 = vsub.f32 %v1054, %v1086
    %v1103 = vmul.f32 %v1087, 1.442695
    %v1104 = vpow.pop %v1103
    %v1105 = vmul.f32 %v1088, 1.442695
    %v1106 = vpow.pop %v1105
    %v1107 = vmul.f32 %v1089, 1.442695
    %v1108 = vpow.pop %v1107
    %v1109 = vmul.f32 %v1090, 1.442695
    %v1110 = vpow.pop %v1109
    %v1111 = vmul.f32 %v1091, 1.442695
    %v1112 = vpow.pop %v1111
    %v1113 = vmul.f32 %v1092, 1.442695
    %v1114 = vpow.pop %v1113
    %v1115 = vmul.f32 %v1093, 1.442695
    %v1116 = vpow.pop %v1115
    %v1117 = vmul.f32 %v1094, 1.442695
    %v1118 = vpow.pop %v1117
    %v1119 = vmul.f32 %v1095, 1.442695
    %v1120 = vpow.pop %v1119
    %v1121 = vmul.f32 %v1096, 1.442695
    %v1122 = vpow.pop %v1121
    %v1123 = vmul.f32 %v1097, 1.442695
    %v1124 = vpow.pop %v1123
    %v1125 = vmul.f32 %v1098, 1.442695
    %v1126 = vpow.pop %v1125
    %v1127 = vmul.f32 %v1099, 1.442695
    %v1128 = vpow.pop %v1127
    %v1129 = vmul.f32 %v1100, 1.442695
    %v1130 = vpow.pop %v1129
    %v1131 = vmul.f32 %v1101, 1.442695
    %v1132 = vpow.pop %v1131
    %v1133 = vmul.f32 %v1102, 1.442695
    %v1134 = vpow.pop %v1133
    %1135 = vadd.xlane.f32.xlu0 %v1104
    %v1136 = vpop.xlane.xlu0 %1135
    %1137 = vadd.xlane.f32.xlu0 %v1106
    %v1138 = vpop.xlane.xlu0 %1137
    %1139 = vadd.xlane.f32.xlu0 %v1108
    %v1140 = vpop.xlane.xlu0 %1139
    %1141 = vadd.xlane.f32.xlu0 %v1110
    %v1142 = vpop.xlane.xlu0 %1141
    %1143 = vadd.xlane.f32.xlu0 %v1112
    %v1144 = vpop.xlane.xlu0 %1143
    %1145 = vadd.xlane.f32.xlu0 %v1114
    %v1146 = vpop.xlane.xlu0 %1145
    %1147 = vadd.xlane.f32.xlu0 %v1116
    %v1148 = vpop.xlane.xlu0 %1147
    %1149 = vadd.xlane.f32.xlu0 %v1118
    %v1150 = vpop.xlane.xlu0 %1149
    %1151 = vadd.xlane.f32.xlu0 %v1120
    %v1152 = vpop.xlane.xlu0 %1151
    %1153 = vadd.xlane.f32.xlu0 %v1122
    %v1154 = vpop.xlane.xlu0 %1153
    %1155 = vadd.xlane.f32.xlu0 %v1124
    %v1156 = vpop.xlane.xlu0 %1155
    %1157 = vadd.xlane.f32.xlu0 %v1126
    %v1158 = vpop.xlane.xlu0 %1157
    %1159 = vadd.xlane.f32.xlu0 %v1128
    %v1160 = vpop.xlane.xlu0 %1159
    %1161 = vadd.xlane.f32.xlu0 %v1130
    %v1162 = vpop.xlane.xlu0 %1161
    %1163 = vadd.xlane.f32.xlu0 %v1132
    %v1164 = vpop.xlane.xlu0 %1163
    %1165 = vadd.xlane.f32.xlu0 %v1134
    %v1166 = vpop.xlane.xlu0 %1165
    %v1167 = vlog2.pop %v1136
    %v1168 = vmul.f32 %v1167, 0.6931472
    %v1169 = vlog2.pop %v1138
    %v1170 = vmul.f32 %v1169, 0.6931472
    %v1171 = vlog2.pop %v1140
    %v1172 = vmul.f32 %v1171, 0.6931472
    %v1173 = vlog2.pop %v1142
    %v1174 = vmul.f32 %v1173, 0.6931472
    %v1175 = vlog2.pop %v1144
    %v1176 = vmul.f32 %v1175, 0.6931472
    %v1177 = vlog2.pop %v1146
    %v1178 = vmul.f32 %v1177, 0.6931472
    %v1179 = vlog2.pop %v1148
    %v1180 = vmul.f32 %v1179, 0.6931472
    %v1181 = vlog2.pop %v1150
    %v1182 = vmul.f32 %v1181, 0.6931472
    %v1183 = vlog2.pop %v1152
    %v1184 = vmul.f32 %v1183, 0.6931472
    %v1185 = vlog2.pop %v1154
    %v1186 = vmul.f32 %v1185, 0.6931472
    %v1187 = vlog2.pop %v1156
    %v1188 = vmul.f32 %v1187, 0.6931472
    %v1189 = vlog2.pop %v1158
    %v1190 = vmul.f32 %v1189, 0.6931472
    %v1191 = vlog2.pop %v1160
    %v1192 = vmul.f32 %v1191, 0.6931472
    %v1193 = vlog2.pop %v1162
    %v1194 = vmul.f32 %v1193, 0.6931472
    %v1195 = vlog2.pop %v1164
    %v1196 = vmul.f32 %v1195, 0.6931472
    %v1197 = vlog2.pop %v1166
    %v1198 = vmul.f32 %v1197, 0.6931472
    %v1199 = vsub.f32 %v1087, %v1168
    %v1200 = vsub.f32 %v1088, %v1170
    %v1201 = vsub.f32 %v1089, %v1172
    %v1202 = vsub.f32 %v1090, %v1174
    %v1203 = vsub.f32 %v1091, %v1176
    %v1204 = vsub.f32 %v1092, %v1178
    %v1205 = vsub.f32 %v1093, %v1180
    %v1206 = vsub.f32 %v1094, %v1182
    %v1207 = vsub.f32 %v1095, %v1184
    %v1208 = vsub.f32 %v1096, %v1186
    %v1209 = vsub.f32 %v1097, %v1188
    %v1210 = vsub.f32 %v1098, %v1190
    %v1211 = vsub.f32 %v1099, %v1192
    %v1212 = vsub.f32 %v1100, %v1194
    %v1213 = vsub.f32 %v1101, %v1196
    %v1214 = vsub.f32 %v1102, %v1198
    %v1215 = vsel %vm1035, %v1199, 0.0
    %v1216 = vsel %vm1035, %v1200, 0.0
    %v1217 = vsel %vm1035, %v1201, 0.0
    %v1218 = vsel %vm1035, %v1202, 0.0
    %v1219 = vsel %vm1035, %v1203, 0.0
    %v1220 = vsel %vm1035, %v1204, 0.0
    %v1221 = vsel %vm1035, %v1205, 0.0
    %v1222 = vsel %vm1035, %v1206, 0.0
    %v1223 = vsel %vm1035, %v1207, 0.0
    %v1224 = vsel %vm1035, %v1208, 0.0
    %v1225 = vsel %vm1035, %v1209, 0.0
    %v1226 = vsel %vm1035, %v1210, 0.0
    %v1227 = vsel %vm1035, %v1211, 0.0
    %v1228 = vsel %vm1035, %v1212, 0.0
    %v1229 = vsel %vm1035, %v1213, 0.0
    %v1230 = vsel %vm1035, %v1214, 0.0
    %v1231 = vadd.f32 %v839, %v1215
    %v1232 = vadd.f32 %v840, %v1216
    %v1233 = vadd.f32 %v841, %v1217
    %v1234 = vadd.f32 %v842, %v1218
    %v1235 = vadd.f32 %v843, %v1219
    %v1236 = vadd.f32 %v844, %v1220
    %v1237 = vadd.f32 %v845, %v1221
    %v1238 = vadd.f32 %v846, %v1222
    %v1239 = vadd.f32 %v847, %v1223
    %v1240 = vadd.f32 %v848, %v1224
    %v1241 = vadd.f32 %v849, %v1225
    %v1242 = vadd.f32 %v850, %v1226
    %v1243 = vadd.f32 %v851, %v1227
    %v1244 = vadd.f32 %v852, %v1228
    %v1245 = vadd.f32 %v853, %v1229
    %v1246 = vadd.f32 %v854, %v1230
    %v1247 = vsel %vm1038, %v969, -1e+30
    %v1248 = vsel %vm1038, %v972, -1e+30
    %v1249 = vsel %vm1038, %v977, -1e+30
    %v1250 = vsel %vm1038, %v980, -1e+30
    %v1251 = vsel %vm1038, %v985, -1e+30
    %v1252 = vsel %vm1038, %v988, -1e+30
    %v1253 = vsel %vm1038, %v993, -1e+30
    %v1254 = vsel %vm1038, %v996, -1e+30
    %v1255 = vsel %vm1038, %v1001, -1e+30
    %v1256 = vsel %vm1038, %v1004, -1e+30
    %v1257 = vsel %vm1038, %v1009, -1e+30
    %v1258 = vsel %vm1038, %v1012, -1e+30
    %v1259 = vsel %vm1038, %v1017, -1e+30
    %v1260 = vsel %vm1038, %v1020, -1e+30
    %v1261 = vsel %vm1038, %v1025, -1e+30
    %v1262 = vsel %vm1038, %v1028, -1e+30
    %1263 = vmax.xlane.f32.xlu0 %v1247
    %v1264 = vpop.xlane.xlu0 %1263
    %1265 = vmax.xlane.f32.xlu0 %v1248
    %v1266 = vpop.xlane.xlu0 %1265
    %1267 = vmax.xlane.f32.xlu0 %v1249
    %v1268 = vpop.xlane.xlu0 %1267
    %1269 = vmax.xlane.f32.xlu0 %v1250
    %v1270 = vpop.xlane.xlu0 %1269
    %1271 = vmax.xlane.f32.xlu0 %v1251
    %v1272 = vpop.xlane.xlu0 %1271
    %1273 = vmax.xlane.f32.xlu0 %v1252
    %v1274 = vpop.xlane.xlu0 %1273
    %1275 = vmax.xlane.f32.xlu0 %v1253
    %v1276 = vpop.xlane.xlu0 %1275
    %1277 = vmax.xlane.f32.xlu0 %v1254
    %v1278 = vpop.xlane.xlu0 %1277
    %1279 = vmax.xlane.f32.xlu0 %v1255
    %v1280 = vpop.xlane.xlu0 %1279
    %1281 = vmax.xlane.f32.xlu0 %v1256
    %v1282 = vpop.xlane.xlu0 %1281
    %1283 = vmax.xlane.f32.xlu0 %v1257
    %v1284 = vpop.xlane.xlu0 %1283
    %1285 = vmax.xlane.f32.xlu0 %v1258
    %v1286 = vpop.xlane.xlu0 %1285
    %1287 = vmax.xlane.f32.xlu0 %v1259
    %v1288 = vpop.xlane.xlu0 %1287
    %1289 = vmax.xlane.f32.xlu0 %v1260
    %v1290 = vpop.xlane.xlu0 %1289
    %1291 = vmax.xlane.f32.xlu0 %v1261
    %v1292 = vpop.xlane.xlu0 %1291
    %1293 = vmax.xlane.f32.xlu0 %v1262
    %v1294 = vpop.xlane.xlu0 %1293
    %v1295 = vsub.f32 %v1247, %v1264
    %v1296 = vsub.f32 %v1248, %v1266
    %v1297 = vsub.f32 %v1249, %v1268
    %v1298 = vsub.f32 %v1250, %v1270
    %v1299 = vsub.f32 %v1251, %v1272
    %v1300 = vsub.f32 %v1252, %v1274
    %v1301 = vsub.f32 %v1253, %v1276
    %v1302 = vsub.f32 %v1254, %v1278
    %v1303 = vsub.f32 %v1255, %v1280
    %v1304 = vsub.f32 %v1256, %v1282
    %v1305 = vsub.f32 %v1257, %v1284
    %v1306 = vsub.f32 %v1258, %v1286
    %v1307 = vsub.f32 %v1259, %v1288
    %v1308 = vsub.f32 %v1260, %v1290
    %v1309 = vsub.f32 %v1261, %v1292
    %v1310 = vsub.f32 %v1262, %v1294
    %v1311 = vmul.f32 %v1295, 1.442695
    %v1312 = vpow.pop %v1311
    %v1313 = vmul.f32 %v1296, 1.442695
    %v1314 = vpow.pop %v1313
    %v1315 = vmul.f32 %v1297, 1.442695
    %v1316 = vpow.pop %v1315
    %v1317 = vmul.f32 %v1298, 1.442695
    %v1318 = vpow.pop %v1317
    %v1319 = vmul.f32 %v1299, 1.442695
    %v1320 = vpow.pop %v1319
    %v1321 = vmul.f32 %v1300, 1.442695
    %v1322 = vpow.pop %v1321
    %v1323 = vmul.f32 %v1301, 1.442695
    %v1324 = vpow.pop %v1323
    %v1325 = vmul.f32 %v1302, 1.442695
    %v1326 = vpow.pop %v1325
    %v1327 = vmul.f32 %v1303, 1.442695
    %v1328 = vpow.pop %v1327
    %v1329 = vmul.f32 %v1304, 1.442695
    %v1330 = vpow.pop %v1329
    %v1331 = vmul.f32 %v1305, 1.442695
    %v1332 = vpow.pop %v1331
    %v1333 = vmul.f32 %v1306, 1.442695
    %v1334 = vpow.pop %v1333
    %v1335 = vmul.f32 %v1307, 1.442695
    %v1336 = vpow.pop %v1335
    %v1337 = vmul.f32 %v1308, 1.442695
    %v1338 = vpow.pop %v1337
    %v1339 = vmul.f32 %v1309, 1.442695
    %v1340 = vpow.pop %v1339
    %v1341 = vmul.f32 %v1310, 1.442695
    %v1342 = vpow.pop %v1341
    %1343 = vadd.xlane.f32.xlu0 %v1312
    %v1344 = vpop.xlane.xlu0 %1343
    %1345 = vadd.xlane.f32.xlu0 %v1314
    %v1346 = vpop.xlane.xlu0 %1345
    %1347 = vadd.xlane.f32.xlu0 %v1316
    %v1348 = vpop.xlane.xlu0 %1347
    %1349 = vadd.xlane.f32.xlu0 %v1318
    %v1350 = vpop.xlane.xlu0 %1349
    %1351 = vadd.xlane.f32.xlu0 %v1320
    %v1352 = vpop.xlane.xlu0 %1351
    %1353 = vadd.xlane.f32.xlu0 %v1322
    %v1354 = vpop.xlane.xlu0 %1353
    %1355 = vadd.xlane.f32.xlu0 %v1324
    %v1356 = vpop.xlane.xlu0 %1355
    %1357 = vadd.xlane.f32.xlu0 %v1326
    %v1358 = vpop.xlane.xlu0 %1357
    %1359 = vadd.xlane.f32.xlu0 %v1328
    %v1360 = vpop.xlane.xlu0 %1359
    %1361 = vadd.xlane.f32.xlu0 %v1330
    %v1362 = vpop.xlane.xlu0 %1361
    %1363 = vadd.xlane.f32.xlu0 %v1332
    %v1364 = vpop.xlane.xlu0 %1363
    %1365 = vadd.xlane.f32.xlu0 %v1334
    %v1366 = vpop.xlane.xlu0 %1365
    %1367 = vadd.xlane.f32.xlu0 %v1336
    %v1368 = vpop.xlane.xlu0 %1367
    %1369 = vadd.xlane.f32.xlu0 %v1338
    %v1370 = vpop.xlane.xlu0 %1369
    %1371 = vadd.xlane.f32.xlu0 %v1340
    %v1372 = vpop.xlane.xlu0 %1371
    %1373 = vadd.xlane.f32.xlu0 %v1342
    %v1374 = vpop.xlane.xlu0 %1373
    %v1375 = vlog2.pop %v1344
    %v1376 = vmul.f32 %v1375, 0.6931472
    %v1377 = vlog2.pop %v1346
    %v1378 = vmul.f32 %v1377, 0.6931472
    %v1379 = vlog2.pop %v1348
    %v1380 = vmul.f32 %v1379, 0.6931472
    %v1381 = vlog2.pop %v1350
    %v1382 = vmul.f32 %v1381, 0.6931472
    %v1383 = vlog2.pop %v1352
    %v1384 = vmul.f32 %v1383, 0.6931472
    %v1385 = vlog2.pop %v1354
    %v1386 = vmul.f32 %v1385, 0.6931472
    %v1387 = vlog2.pop %v1356
    %v1388 = vmul.f32 %v1387, 0.6931472
    %v1389 = vlog2.pop %v1358
    %v1390 = vmul.f32 %v1389, 0.6931472
    %v1391 = vlog2.pop %v1360
    %v1392 = vmul.f32 %v1391, 0.6931472
    %v1393 = vlog2.pop %v1362
    %v1394 = vmul.f32 %v1393, 0.6931472
    %v1395 = vlog2.pop %v1364
    %v1396 = vmul.f32 %v1395, 0.6931472
    %v1397 = vlog2.pop %v1366
    %v1398 = vmul.f32 %v1397, 0.6931472
    %v1399 = vlog2.pop %v1368
    %v1400 = vmul.f32 %v1399, 0.6931472
    %v1401 = vlog2.pop %v1370
    %v1402 = vmul.f32 %v1401, 0.6931472
    %v1403 = vlog2.pop %v1372
    %v1404 = vmul.f32 %v1403, 0.6931472
    %v1405 = vlog2.pop %v1374
    %v1406 = vmul.f32 %v1405, 0.6931472
    %v1407 = vsub.f32 %v1295, %v1376
    %v1408 = vsub.f32 %v1296, %v1378
    %v1409 = vsub.f32 %v1297, %v1380
    %v1410 = vsub.f32 %v1298, %v1382
    %v1411 = vsub.f32 %v1299, %v1384
    %v1412 = vsub.f32 %v1300, %v1386
    %v1413 = vsub.f32 %v1301, %v1388
    %v1414 = vsub.f32 %v1302, %v1390
    %v1415 = vsub.f32 %v1303, %v1392
    %v1416 = vsub.f32 %v1304, %v1394
    %v1417 = vsub.f32 %v1305, %v1396
    %v1418 = vsub.f32 %v1306, %v1398
    %v1419 = vsub.f32 %v1307, %v1400
    %v1420 = vsub.f32 %v1308, %v1402
    %v1421 = vsub.f32 %v1309, %v1404
    %v1422 = vsub.f32 %v1310, %v1406
    %v1423 = vsel %vm1038, %v1407, 0.0
    %v1424 = vsel %vm1038, %v1408, 0.0
    %v1425 = vsel %vm1038, %v1409, 0.0
    %v1426 = vsel %vm1038, %v1410, 0.0
    %v1427 = vsel %vm1038, %v1411, 0.0
    %v1428 = vsel %vm1038, %v1412, 0.0
    %v1429 = vsel %vm1038, %v1413, 0.0
    %v1430 = vsel %vm1038, %v1414, 0.0
    %v1431 = vsel %vm1038, %v1415, 0.0
    %v1432 = vsel %vm1038, %v1416, 0.0
    %v1433 = vsel %vm1038, %v1417, 0.0
    %v1434 = vsel %vm1038, %v1418, 0.0
    %v1435 = vsel %vm1038, %v1419, 0.0
    %v1436 = vsel %vm1038, %v1420, 0.0
    %v1437 = vsel %vm1038, %v1421, 0.0
    %v1438 = vsel %vm1038, %v1422, 0.0
    %v1439 = vadd.f32 %v1231, %v1423
    %v1440 = vadd.f32 %v1232, %v1424
    %v1441 = vadd.f32 %v1233, %v1425
    %v1442 = vadd.f32 %v1234, %v1426
    %v1443 = vadd.f32 %v1235, %v1427
    %v1444 = vadd.f32 %v1236, %v1428
    %v1445 = vadd.f32 %v1237, %v1429
    %v1446 = vadd.f32 %v1238, %v1430
    %v1447 = vadd.f32 %v1239, %v1431
    %v1448 = vadd.f32 %v1240, %v1432
    %v1449 = vadd.f32 %v1241, %v1433
    %v1450 = vadd.f32 %v1242, %v1434
    %v1451 = vadd.f32 %v1243, %v1435
    %v1452 = vadd.f32 %v1244, %v1436
    %v1453 = vadd.f32 %v1245, %v1437
    %v1454 = vadd.f32 %v1246, %v1438
    %1455 = vst [vmem:[#allocation10] sm:$0xff] %v1439
    %1456 = vst [vmem:[#allocation10 + $0x8] sm:$0xff] %v1440
    %1457 = vst [vmem:[#allocation10 + $0x10] sm:$0xff] %v1441
    %1458 = vst [vmem:[#allocation10 + $0x18] sm:$0xff] %v1442
    %1459 = vst [vmem:[#allocation10 + $0x20] sm:$0xff] %v1443
    %1460 = vst [vmem:[#allocation10 + $0x28] sm:$0xff] %v1444
    %1461 = vst [vmem:[#allocation10 + $0x30] sm:$0xff] %v1445
    %1462 = vst [vmem:[#allocation10 + $0x38] sm:$0xff] %v1446
    %1463 = vst [vmem:[#allocation10 + $0x40] sm:$0xff] %v1447
    %1464 = vst [vmem:[#allocation10 + $0x48] sm:$0xff] %v1448
    %1465 = vst [vmem:[#allocation10 + $0x50] sm:$0xff] %v1449
    %1466 = vst [vmem:[#allocation10 + $0x58] sm:$0xff] %v1450
    %1467 = vst [vmem:[#allocation10 + $0x60] sm:$0xff] %v1451
    %1468 = vst [vmem:[#allocation10 + $0x68] sm:$0xff] %v1452
    %1469 = vst [vmem:[#allocation10 + $0x70] sm:$0xff] %v1453
    %1470 = vst [vmem:[#allocation10 + $0x78] sm:$0xff] %v1454
    // Predicated region
    $region38: #{tpu_custom_call.1} parent=1 // pred_check
      _
    $region39: #{tpu_custom_call.1} parent=1 // pred_check_branch
      %1472 = sbr.rel (0) target = $region41
    $region40: #{tpu_custom_call.1} parent=1 // pred_region
      %s1474 = ssub.s32 2048, 2048
      %1475 = vsyncadd [#allocation4], %s1474
      %s1476 = sshll.u32 [#allocation10], 4
      %s1477 = int_to_ptr.vmem [resolvable:$true] %s1476
      %1482 = dma.vmem_to_hbm [thread:$0]  %s1477, 2048, %s5, [#allocation4], 128, 128, 8
    $region41: #{tpu_custom_call.1} parent=1 // pred_fallthru
      _
    // Predicated region
    $region42: #{tpu_custom_call.1} parent=1 // pred_check
      _
    $region43: #{tpu_custom_call.1} parent=1 // pred_check_branch
      %1484 = sbr.rel (0) target = $region45
    $region44: #{tpu_custom_call.1} parent=1 // pred_region
      %1485 = dma.done [#allocation4], 2048
    $region45: #{tpu_custom_call.1} parent=1 // pred_fallthru
      _
    %1486 = vsyncpa [#allocation3], 1
    %1487 = vsyncpa [#allocation6], 1
    %1488 = vsyncpa [#allocation9], 1
    %1489 = vsyncpa [#allocation4], 1

</llo_original>
